<compile_context>
chip_gen: v5e
topology: v5e:2x2
jax: 0.10.0
libtpu: 0.0.40
codegen_flags: <defaults>
</compile_context>

<pallas_src>
import jax
import jax.numpy as jnp
import numpy as np
from jax.experimental import pallas as pl
from jax.experimental.pallas import tpu as pltpu

# ---- SimpleConv1DModel default hyper-parameters -----------------------------
IN_FEATURES = 15   # L  (sequence length of the 1-D conv)
OC1 = 32           # out_channels1
OC2 = 64           # out_channels2
HIDDEN = 128       # hidden_size
OUT_FEATURES = 4   # out_features
OUT_PAD = 128      # lane-dense padded output width (>= OUT_FEATURES, multiple of 128)
K = 3              # kernel_size
PAD = 1            # padding

DTYPE = jnp.float32


# -----------------------------------------------------------------------------
# Pallas kernel: one batch tile per grid step, whole forward pass.
# -----------------------------------------------------------------------------
def _simple_conv1d_kernel(x_ref,     # (BT, L)          bf16  raw input row
                          w1_ref,    # (L, L*OC1)       bf16  conv1 (banded, im2col folded)
                          b1_ref,    # (1, L*OC1)       f32
                          w2_ref,    # (L*OC1, L*OC2)   bf16  conv2 (banded)
                          b2_ref,    # (1, L*OC2)       f32
                          wf1_ref,   # (L*OC2, HIDDEN)  bf16
                          bf1_ref,   # (1, HIDDEN)      f32
                          wf2_ref,   # (HIDDEN, OUT_PAD) bf16 (zero-padded columns)
                          bf2_ref,   # (1, OUT_PAD)     f32  (zero-padded columns)
                          out_ref):  # (BT, OUT_PAD)    f32
    f32 = jnp.float32
    bf16 = jnp.bfloat16

    # conv1 + ReLU over all L output positions at once (input already bf16).
    h1 = jnp.dot(x_ref[...], w1_ref[...], preferred_element_type=f32)
    h1 = jnp.maximum(h1 + b1_ref[...], 0.0)                      # (BT, L*OC1)

    # conv2 + ReLU (banded weight already encodes the zero padding of h1).
    h2 = jnp.dot(h1.astype(bf16), w2_ref[...], preferred_element_type=f32)
    h2 = jnp.maximum(h2 + b2_ref[...], 0.0)                      # (BT, L*OC2)

    # fc1 + ReLU (single contraction over the flattened (l, c2) axis).
    h3 = jnp.dot(h2.astype(bf16), wf1_ref[...], preferred_element_type=f32)
    h3 = jnp.maximum(h3 + bf1_ref[...], 0.0)                     # (BT, HIDDEN)

    # fc2 (lane-dense, zero-padded to OUT_PAD columns -> unmasked stores).
    out = jnp.dot(h3.astype(bf16), wf2_ref[...], preferred_element_type=f32)
    out_ref[...] = (out + bf2_ref[...]).astype(out_ref.dtype)    # (BT, OUT_PAD)


# -----------------------------------------------------------------------------
# Batch-tile selection (MXU / megacore aware)
# -----------------------------------------------------------------------------
def _round_up(x, m):
    return ((x + m - 1) // m) * m


def _pick_batch_tile(B):
    if B <= 256:
        # Small batch: single tile, padded to a full 8-row f32 sublane tile.
        return _round_up(max(B, 8), 8)
    if B <= 512:
        # 2+ grid steps keeps both v7x TensorCores busy; 256 fills the MXU M-tile.
        return 256
    # Large batch: big MXU-aligned tiles (fewer ~0.35us grid-step overheads) while
    # guaranteeing >= 2 grid steps for the "parallel" axis.
    return max(256, min(1024, _round_up(B // 2, 256)))


# -----------------------------------------------------------------------------
# Wrapper
# -----------------------------------------------------------------------------
def simple_conv1d_forward(x, kernel_params, *, batch_tile=None):
    """x: (B, IN_FEATURES) float32  ->  (B, OUT_FEATURES) float32."""
    (w1, b1, w2, b2, wf1, bf1, wf2, bf2) = kernel_params
    B, L = x.shape
    assert L == IN_FEATURES

    if batch_tile is None:
        batch_tile = _pick_batch_tile(B)
    n_tiles = pl.cdiv(B, batch_tile)
    Bp = n_tiles * batch_tile

    # Pre-cast to bf16 (halves the per-row HBM read; kernel feeds the MXU directly).
    x_bf = x.astype(jnp.bfloat16)
    if Bp != B:
        x_bf = jnp.pad(x_bf, ((0, Bp - B), (0, 0)))

    bmap = lambda i: (i, 0)        # batch-tiled arrays
    wmap = lambda i: (0, 0)        # weights/biases: single resident block
    # NOTE: constant-index weight blocks would ideally be single-buffered
    # (pl.Buffered(1)); left at the default to stay conservative across JAX versions.
    full = lambda a: pl.BlockSpec(a.shape, wmap)

    out = pl.pallas_call(
        _simple_conv1d_kernel,
        out_shape=jax.ShapeDtypeStruct((Bp, OUT_PAD), jnp.float32),
        grid=(n_tiles,),
        in_specs=[pl.BlockSpec((batch_tile, L), bmap),
                  full(w1), full(b1), full(w2), full(b2),
                  full(wf1), full(bf1), full(wf2), full(bf2)],
        out_specs=pl.BlockSpec((batch_tile, OUT_PAD), bmap),
        compiler_params=pltpu.CompilerParams(
            dimension_semantics=("parallel",)),
    )(x_bf, w1, b1, w2, b2, wf1, bf1, wf2, bf2)
    return out[:B, :OUT_FEATURES]


# -----------------------------------------------------------------------------
# Deterministic parameter initialization (PyTorch-layout tensors) + repacking
# -----------------------------------------------------------------------------
def init_torch_style_params(key):
    keys = jax.random.split(key, 8)

    def u(k, shape, fan_in):
        bound = 1.0 / np.sqrt(fan_in)
        return jax.random.uniform(k, shape, DTYPE, -bound, bound)

    conv1_w = u(keys[0], (OC1, 1, K), 1 * K)
    conv1_b = u(keys[1], (OC1,), 1 * K)
    conv2_w = u(keys[2], (OC2, OC1, K), OC1 * K)
    conv2_b = u(keys[3], (OC2,), OC1 * K)
    fc1_w = u(keys[4], (HIDDEN, OC2 * IN_FEATURES), OC2 * IN_FEATURES)
    fc1_b = u(keys[5], (HIDDEN,), OC2 * IN_FEATURES)
    fc2_w = u(keys[6], (OUT_FEATURES, HIDDEN), HIDDEN)
    fc2_b = u(keys[7], (OUT_FEATURES,), HIDDEN)
    return (conv1_w, conv1_b, conv2_w, conv2_b, fc1_w, fc1_b, fc2_w, fc2_b)


def pack_params_for_kernel(p):
    """Densify both convs into single matmul weights; fix fc1 flatten order;
    lane-pad fc2 to OUT_PAD output columns."""
    (c1w, c1b, c2w, c2b, f1w, f1b, f2w, f2b) = [np.asarray(a, np.float32) for a in p]
    L = IN_FEATURES

    # conv1 (in_channels=1) as one banded matmul with the im2col folded in:
    #   W1[j, l*OC1 + c] = conv1_w[c, 0, j - l + PAD]   for 0 <= j - l + PAD < K
    w1_bnd = np.zeros((L, L * OC1), dtype=np.float32)
    for l in range(L):
        for k in range(K):
            j = l + k - PAD
            if 0 <= j < L:
                w1_bnd[j, l * OC1:(l + 1) * OC1] = c1w[:, 0, k]
    b1_rep = np.tile(c1b[None, :], (1, L))                            # (1, L*OC1)

    # conv2 as one banded matmul (zero padding of h1 folded into the band):
    #   W2[l'*OC1 + c1, l*OC2 + c2] = conv2_w[c2, c1, l' - l + PAD]
    w2_bnd = np.zeros((L * OC1, L * OC2), dtype=np.float32)
    for l in range(L):
        for k in range(K):
            lp = l + k - PAD
            if 0 <= lp < L:
                w2_bnd[lp * OC1:(lp + 1) * OC1,
                       l * OC2:(l + 1) * OC2] = c2w[:, :, k].T
    b2_rep = np.tile(c2b[None, :], (1, L))                            # (1, L*OC2)

    # fc1: PyTorch flattens conv2 output as (c2, l); kernel layout is (l, c2).
    wf1 = np.transpose(f1w.reshape(HIDDEN, OC2, L), (2, 1, 0)).reshape(L * OC2, HIDDEN)
    bf1 = f1b[None, :]

    # fc2: lane-dense output — zero-pad to OUT_PAD columns (host slices them off).
    wf2 = np.zeros((HIDDEN, OUT_PAD), dtype=np.float32)
    wf2[:, :OUT_FEATURES] = f2w.T
    bf2 = np.zeros((1, OUT_PAD), dtype=np.float32)
    bf2[0, :OUT_FEATURES] = f2b

    bf = lambda a: jnp.asarray(a, dtype=jnp.bfloat16)   # MXU operands
    fl = lambda a: jnp.asarray(a, dtype=jnp.float32)    # biases stay f32
    return (bf(w1_bnd), fl(b1_rep), bf(w2_bnd), fl(b2_rep),
            bf(wf1), fl(bf1), bf(wf2), fl(bf2))


# -----------------------------------------------------------------------------
# Pure-JAX reference mirroring the PyTorch forward (for validation only)
# -----------------------------------------------------------------------------
def reference_forward(x, p):
    (c1w, c1b, c2w, c2b, f1w, f1b, f2w, f2b) = p
    h = x[:, None, :]                                                 # (B, 1, L) NCW

    def conv1d(inp, w, b):
        out = jax.lax.conv_general_dilated(
            inp, w, window_strides=(1,), padding=((PAD, PAD),),
            dimension_numbers=("NCH", "OIH", "NCH"))
        return out + b[None, :, None]

    h = jax.nn.relu(conv1d(h, c1w, c1b))
    h = jax.nn.relu(conv1d(h, c2w, c2b))
    h = h.reshape(h.shape[0], -1)                                     # (B, OC2*L)
    h = jax.nn.relu(h @ f1w.T + f1b)
    return h @ f2w.T + f2b


# -----------------------------------------------------------------------------
if __name__ == "__main__":
    key = jax.random.PRNGKey(0)
    pkey, xkey = jax.random.split(key)

    torch_style = init_torch_style_params(pkey)
    kernel_params = pack_params_for_kernel(torch_style)

    B = 4
    x = jax.random.normal(xkey, (B, IN_FEATURES), DTYPE)

    out = simple_conv1d_forward(x, kernel_params)
    out = jax.block_until_ready(out)
    assert out.shape == (B, OUT_FEATURES)

    ref = reference_forward(x, torch_style)
    # Tolerance covers the bf16 MXU inputs (f32 accumulation).
    np.testing.assert_allclose(np.asarray(out), np.asarray(ref),
                               rtol=2e-2, atol=2e-2)
    print("KERNEL_OK")
</pallas_src>

<mosaic_0001>
module attributes {stable_mosaic.version = 11 : i64} {
  func.func @_simple_conv1d_kernel(%arg0: i32, %arg1: memref<8x15xbf16, #tpu.memory_space<vmem>>, %arg2: memref<15x480xbf16, #tpu.memory_space<vmem>>, %arg3: memref<1x480xf32, #tpu.memory_space<vmem>>, %arg4: memref<480x960xbf16, #tpu.memory_space<vmem>>, %arg5: memref<1x960xf32, #tpu.memory_space<vmem>>, %arg6: memref<960x128xbf16, #tpu.memory_space<vmem>>, %arg7: memref<1x128xf32, #tpu.memory_space<vmem>>, %arg8: memref<128x128xbf16, #tpu.memory_space<vmem>>, %arg9: memref<1x128xf32, #tpu.memory_space<vmem>>, %arg10: memref<8x128xf32, #tpu.memory_space<vmem>>) attributes {dimension_semantics = [#tpu.dimension_semantics<parallel>], iteration_bounds = array<i64: 1>, scalar_prefetch = 0 : i64, scratch_operands = 0 : i64, tpu.core_type = #tpu.core_type<tc>, window_params = [{transform_indices = @transform_0, window_bounds = array<i64: 8, 15>}, {pipeline_mode = #tpu.pipeline_mode<synchronous>, transform_indices = @transform_1, window_bounds = array<i64: 15, 480>}, {pipeline_mode = #tpu.pipeline_mode<synchronous>, transform_indices = @transform_2, window_bounds = array<i64: 1, 480>}, {pipeline_mode = #tpu.pipeline_mode<synchronous>, transform_indices = @transform_3, window_bounds = array<i64: 480, 960>}, {pipeline_mode = #tpu.pipeline_mode<synchronous>, transform_indices = @transform_4, window_bounds = array<i64: 1, 960>}, {pipeline_mode = #tpu.pipeline_mode<synchronous>, transform_indices = @transform_5, window_bounds = array<i64: 960, 128>}, {pipeline_mode = #tpu.pipeline_mode<synchronous>, transform_indices = @transform_6, window_bounds = array<i64: 1, 128>}, {pipeline_mode = #tpu.pipeline_mode<synchronous>, transform_indices = @transform_7, window_bounds = array<i64: 128, 128>}, {pipeline_mode = #tpu.pipeline_mode<synchronous>, transform_indices = @transform_8, window_bounds = array<i64: 1, 128>}, {transform_indices = @transform_9, window_bounds = array<i64: 8, 128>}]} {
    %c0 = arith.constant 0 : index
    %c0_0 = arith.constant 0 : index
    %0 = vector.load %arg1[%c0, %c0_0] : memref<8x15xbf16, #tpu.memory_space<vmem>>, vector<8x15xbf16>
    %c0_1 = arith.constant 0 : index
    %c0_2 = arith.constant 0 : index
    %1 = vector.load %arg2[%c0_1, %c0_2] : memref<15x480xbf16, #tpu.memory_space<vmem>>, vector<15x480xbf16>
    %cst = arith.constant dense<0.000000e+00> : vector<8x480xf32>
    %2 = tpu.matmul %0, %1, %cst {dimension_numbers = #tpu.dot_dimension_numbers<[1], [0], [0], [1], [0, 0, 1, 1], [], []>} : vector<8x15xbf16>, vector<15x480xbf16>, vector<8x480xf32> -> vector<8x480xf32>
    %c0_3 = arith.constant 0 : index
    %c0_4 = arith.constant 0 : index
    %3 = vector.load %arg3[%c0_3, %c0_4] : memref<1x480xf32, #tpu.memory_space<vmem>>, vector<1x480xf32>
    %4 = vector.broadcast %3 : vector<1x480xf32> to vector<8x480xf32>
    %5 = arith.addf %2, %4 : vector<8x480xf32>
    %cst_5 = arith.constant 0.000000e+00 : f32
    %6 = vector.broadcast %cst_5 : f32 to vector<8x480xf32>
    %7 = arith.maximumf %5, %6 : vector<8x480xf32>
    %8 = arith.truncf %7 : vector<8x480xf32> to vector<8x480xbf16>
    %c0_6 = arith.constant 0 : index
    %c0_7 = arith.constant 0 : index
    %9 = vector.load %arg4[%c0_6, %c0_7] : memref<480x960xbf16, #tpu.memory_space<vmem>>, vector<480x960xbf16>
    %cst_8 = arith.constant dense<0.000000e+00> : vector<8x960xf32>
    %10 = tpu.matmul %8, %9, %cst_8 {dimension_numbers = #tpu.dot_dimension_numbers<[1], [0], [0], [1], [0, 0, 1, 1], [], []>} : vector<8x480xbf16>, vector<480x960xbf16>, vector<8x960xf32> -> vector<8x960xf32>
    %c0_9 = arith.constant 0 : index
    %c0_10 = arith.constant 0 : index
    %11 = vector.load %arg5[%c0_9, %c0_10] : memref<1x960xf32, #tpu.memory_space<vmem>>, vector<1x960xf32>
    %12 = vector.broadcast %11 : vector<1x960xf32> to vector<8x960xf32>
    %13 = arith.addf %10, %12 : vector<8x960xf32>
    %cst_11 = arith.constant 0.000000e+00 : f32
    %14 = vector.broadcast %cst_11 : f32 to vector<8x960xf32>
    %15 = arith.maximumf %13, %14 : vector<8x960xf32>
    %16 = arith.truncf %15 : vector<8x960xf32> to vector<8x960xbf16>
    %c0_12 = arith.constant 0 : index
    %c0_13 = arith.constant 0 : index
    %17 = vector.load %arg6[%c0_12, %c0_13] : memref<960x128xbf16, #tpu.memory_space<vmem>>, vector<960x128xbf16>
    %cst_14 = arith.constant dense<0.000000e+00> : vector<8x128xf32>
    %18 = tpu.matmul %16, %17, %cst_14 {dimension_numbers = #tpu.dot_dimension_numbers<[1], [0], [0], [1], [0, 0, 1, 1], [], []>} : vector<8x960xbf16>, vector<960x128xbf16>, vector<8x128xf32> -> vector<8x128xf32>
    %c0_15 = arith.constant 0 : index
    %c0_16 = arith.constant 0 : index
    %19 = vector.load %arg7[%c0_15, %c0_16] : memref<1x128xf32, #tpu.memory_space<vmem>>, vector<1x128xf32>
    %20 = vector.broadcast %19 : vector<1x128xf32> to vector<8x128xf32>
    %21 = arith.addf %18, %20 : vector<8x128xf32>
    %cst_17 = arith.constant 0.000000e+00 : f32
    %22 = vector.broadcast %cst_17 : f32 to vector<8x128xf32>
    %23 = arith.maximumf %21, %22 : vector<8x128xf32>
    %24 = arith.truncf %23 : vector<8x128xf32> to vector<8x128xbf16>
    %c0_18 = arith.constant 0 : index
    %c0_19 = arith.constant 0 : index
    %25 = vector.load %arg8[%c0_18, %c0_19] : memref<128x128xbf16, #tpu.memory_space<vmem>>, vector<128x128xbf16>
    %cst_20 = arith.constant dense<0.000000e+00> : vector<8x128xf32>
    %26 = tpu.matmul %24, %25, %cst_20 {dimension_numbers = #tpu.dot_dimension_numbers<[1], [0], [0], [1], [0, 0, 1, 1], [], []>} : vector<8x128xbf16>, vector<128x128xbf16>, vector<8x128xf32> -> vector<8x128xf32>
    %c0_21 = arith.constant 0 : index
    %c0_22 = arith.constant 0 : index
    %27 = vector.load %arg9[%c0_21, %c0_22] : memref<1x128xf32, #tpu.memory_space<vmem>>, vector<1x128xf32>
    %28 = vector.broadcast %27 : vector<1x128xf32> to vector<8x128xf32>
    %29 = arith.addf %26, %28 : vector<8x128xf32>
    %c0_23 = arith.constant 0 : index
    %c0_24 = arith.constant 0 : index
    %30 = vector.load %arg10[%c0_23, %c0_24] : memref<8x128xf32, #tpu.memory_space<vmem>>, vector<8x128xf32>
    tpu.vector_store %arg10[%c0_23, %c0_24], %29 {strides = array<i32>} : memref<8x128xf32, #tpu.memory_space<vmem>>, vector<8x128xf32>,
    return
  }
  func.func @transform_0(%arg0: i32) -> (i32, i32) {
    %c0_i32 = arith.constant 0 : i32
    %c0_i32_0 = arith.constant 0 : i32
    return %arg0, %c0_i32 : i32, i32
  }
  func.func @transform_1(%arg0: i32) -> (i32, i32) {
    %c0_i32 = arith.constant 0 : i32
    %c0_i32_0 = arith.constant 0 : i32
    %c0_i32_1 = arith.constant 0 : i32
    return %c0_i32, %c0_i32_0 : i32, i32
  }
  func.func @transform_2(%arg0: i32) -> (i32, i32) {
    %c0_i32 = arith.constant 0 : i32
    %c0_i32_0 = arith.constant 0 : i32
    %c0_i32_1 = arith.constant 0 : i32
    return %c0_i32, %c0_i32_0 : i32, i32
  }
  func.func @transform_3(%arg0: i32) -> (i32, i32) {
    %c0_i32 = arith.constant 0 : i32
    %c0_i32_0 = arith.constant 0 : i32
    %c0_i32_1 = arith.constant 0 : i32
    return %c0_i32, %c0_i32_0 : i32, i32
  }
  func.func @transform_4(%arg0: i32) -> (i32, i32) {
    %c0_i32 = arith.constant 0 : i32
    %c0_i32_0 = arith.constant 0 : i32
    %c0_i32_1 = arith.constant 0 : i32
    return %c0_i32, %c0_i32_0 : i32, i32
  }
  func.func @transform_5(%arg0: i32) -> (i32, i32) {
    %c0_i32 = arith.constant 0 : i32
    %c0_i32_0 = arith.constant 0 : i32
    %c0_i32_1 = arith.constant 0 : i32
    return %c0_i32, %c0_i32_0 : i32, i32
  }
  func.func @transform_6(%arg0: i32) -> (i32, i32) {
    %c0_i32 = arith.constant 0 : i32
    %c0_i32_0 = arith.constant 0 : i32
    %c0_i32_1 = arith.constant 0 : i32
    return %c0_i32, %c0_i32_0 : i32, i32
  }
  func.func @transform_7(%arg0: i32) -> (i32, i32) {
    %c0_i32 = arith.constant 0 : i32
    %c0_i32_0 = arith.constant 0 : i32
    %c0_i32_1 = arith.constant 0 : i32
    return %c0_i32, %c0_i32_0 : i32, i32
  }
  func.func @transform_8(%arg0: i32) -> (i32, i32) {
    %c0_i32 = arith.constant 0 : i32
    %c0_i32_0 = arith.constant 0 : i32
    %c0_i32_1 = arith.constant 0 : i32
    return %c0_i32, %c0_i32_0 : i32, i32
  }
  func.func @transform_9(%arg0: i32) -> (i32, i32) {
    %c0_i32 = arith.constant 0 : i32
    %c0_i32_0 = arith.constant 0 : i32
    return %arg0, %c0_i32 : i32, i32
  }
}

</mosaic_0001>

<llo_original>
// kernel: tpu_custom_call.1
$region0: #{tpu_custom_call.1}
  #allocation0 [shape = 'u32[]', space=smem, size = 0x4, offset = 0x4, fixed_abs, tag = 'smem constant byte address 0x4 - core index']
  #allocation1 [shape = 'u32[72,128]{1,0:T(1,128)}', space=vmem, size = 0x9000, scoped, tag = 'internal scratch']
  %s0 = inlined_call_operand.hbm [shape: bf16[8,15], index: 0, kind: input, shape index: {}]
  %s1 = inlined_call_operand.hbm [shape: bf16[15,480], index: 1, kind: input, shape index: {}]
  %s2 = inlined_call_operand.hbm [shape: f32[1,480], index: 2, kind: input, shape index: {}]
  %s3 = inlined_call_operand.hbm [shape: bf16[480,960], index: 3, kind: input, shape index: {}]
  %s4 = inlined_call_operand.hbm [shape: f32[1,960], index: 4, kind: input, shape index: {}]
  %s5 = inlined_call_operand.hbm [shape: bf16[960,128], index: 5, kind: input, shape index: {}]
  %s6 = inlined_call_operand.vmem [shape: f32[1,128], index: 6, kind: input, shape index: {}]
  %s7 = inlined_call_operand.hbm [shape: bf16[128,128], index: 7, kind: input, shape index: {}]
  %s8 = inlined_call_operand.vmem [shape: f32[1,128], index: 8, kind: input, shape index: {}]
  %s9 = inlined_call_operand.hbm [shape: f32[8,128], index: 9, kind: output, shape index: {}]
  %s10 = sld [smem:[#allocation0]]
  $region74: #{tpu_custom_call.1} parent=0
    _
  %s12 = ssub.s32 1, %s10
  %s13 = scalar_select 0, %s12, %s10
  $region1: #{tpu_custom_call.1} parent=0
    #allocation2 [shape = 'u8[2048]{0}', space=vmem, size = 0x800, scoped, tag = 'input window, operand 0, single buffered']
    #allocation3 [shape = 's32[1]{0}', space=sflag, size = 0x4, scoped, tag = 'scoped memory for tpu_custom_call.1']
    #allocation4 [shape = 's32[1]{0}', space=sflag, size = 0x4, scoped, tag = 'scoped memory for tpu_custom_call.1']
    #allocation5 [shape = 'u8[16384]{0}', space=vmem, size = 0x4000, scoped, tag = 'input window, operand 1, single buffered']
    #allocation6 [shape = 's32[1]{0}', space=sflag, size = 0x4, scoped, tag = 'scoped memory for tpu_custom_call.1']
    #allocation7 [shape = 'u8[2048]{0}', space=vmem, size = 0x800, scoped, tag = 'input window, operand 2, single buffered']
    #allocation8 [shape = 'u8[983040]{0}', space=vmem, size = 0xf0000, scoped, tag = 'input window, operand 3, single buffered']
    #allocation9 [shape = 's32[1]{0}', space=sflag, size = 0x4, scoped, tag = 'scoped memory for tpu_custom_call.1']
    #allocation10 [shape = 'u8[4096]{0}', space=vmem, size = 0x1000, scoped, tag = 'input window, operand 4, single buffered']
    #allocation11 [shape = 'u8[245760]{0}', space=vmem, size = 0x3c000, scoped, tag = 'input window, operand 5, single buffered']
    #allocation12 [shape = 's32[1]{0}', space=sflag, size = 0x4, scoped, tag = 'scoped memory for tpu_custom_call.1']
    #allocation13 [shape = 'u8[32768]{0}', space=vmem, size = 0x8000, scoped, tag = 'input window, operand 7, single buffered']
    #allocation14 [shape = 'u8[4096]{0}', space=vmem, size = 0x1000, scoped, tag = 'output window, operand 0, single buffered']
    %14 = vsyncpa [#allocation3], 0
    %15 = vsyncpa [#allocation6], 0
    %16 = vsyncpa [#allocation9], 0
    %17 = vsyncpa [#allocation12], 0
    %18 = vsyncpa [#allocation4], 0
    // Predicated region
    $region2: #{tpu_custom_call.1} parent=1 // pred_check
      _
    $region3: #{tpu_custom_call.1} parent=1 // pred_check_branch
      %20 = sbr.rel (0) target = $region5
    $region4: #{tpu_custom_call.1} parent=1 // pred_region
      %22 = vsyncadd [#allocation3], 0
      %s24 = sshll.u32 %s0, 4
      %s25 = int_to_ptr.hbm [resolvable:$true] %s24
      %s26 = sshll.u32 [#allocation2], 4
      %s27 = int_to_ptr.vmem [resolvable:$true] %s26
      %29 = dma.hbm_to_vmem [thread:$0]  %s25, 64, %s27, [#allocation3]
    $region5: #{tpu_custom_call.1} parent=1 // pred_fallthru
      _
    // Predicated region
    $region6: #{tpu_custom_call.1} parent=1 // pred_check
      _
    $region7: #{tpu_custom_call.1} parent=1 // pred_check_branch
      %31 = sbr.rel (0) target = $region9
    $region8: #{tpu_custom_call.1} parent=1 // pred_region
      %33 = vsyncadd [#allocation6], 0
      %s34 = sshll.u32 %s1, 4
      %s35 = int_to_ptr.hbm [resolvable:$true] %s34
      %s36 = sshll.u32 [#allocation5], 4
      %s37 = int_to_ptr.vmem [resolvable:$true] %s36
      %42 = dma.hbm_to_vmem [thread:$0]  %s35, 512, %s37, [#allocation6], 256, 256, 16
    $region9: #{tpu_custom_call.1} parent=1 // pred_fallthru
      _
    // Predicated region
    $region10: #{tpu_custom_call.1} parent=1 // pred_check
      _
    $region11: #{tpu_custom_call.1} parent=1 // pred_check_branch
      %44 = sbr.rel (0) target = $region13
    $region12: #{tpu_custom_call.1} parent=1 // pred_region
      %46 = vsyncadd [#allocation6], 0
      %s48 = sshll.u32 %s2, 4
      %s49 = int_to_ptr.hbm [resolvable:$true] %s48
      %s50 = sshll.u32 [#allocation7], 4
      %s51 = int_to_ptr.vmem [resolvable:$true] %s50
      %53 = dma.hbm_to_vmem [thread:$0]  %s49, 64, %s51, [#allocation6]
    $region13: #{tpu_custom_call.1} parent=1 // pred_fallthru
      _
    // Predicated region
    $region14: #{tpu_custom_call.1} parent=1 // pred_check
      _
    $region15: #{tpu_custom_call.1} parent=1 // pred_check_branch
      %55 = sbr.rel (0) target = $region17
    $region16: #{tpu_custom_call.1} parent=1 // pred_region
      %57 = vsyncadd [#allocation9], 0
      %s58 = sshll.u32 %s3, 4
      %s59 = int_to_ptr.hbm [resolvable:$true] %s58
      %s60 = sshll.u32 [#allocation8], 4
      %s61 = int_to_ptr.vmem [resolvable:$true] %s60
      %66 = dma.hbm_to_vmem [thread:$0]  %s59, 30720, %s61, [#allocation9], 512, 512, 32
    $region17: #{tpu_custom_call.1} parent=1 // pred_fallthru
      _
    // Predicated region
    $region18: #{tpu_custom_call.1} parent=1 // pred_check
      _
    $region19: #{tpu_custom_call.1} parent=1 // pred_check_branch
      %68 = sbr.rel (0) target = $region21
    $region20: #{tpu_custom_call.1} parent=1 // pred_region
      %70 = vsyncadd [#allocation9], 0
      %s72 = sshll.u32 %s4, 4
      %s73 = int_to_ptr.hbm [resolvable:$true] %s72
      %s74 = sshll.u32 [#allocation10], 4
      %s75 = int_to_ptr.vmem [resolvable:$true] %s74
      %77 = dma.hbm_to_vmem [thread:$0]  %s73, 128, %s75, [#allocation9]
    $region21: #{tpu_custom_call.1} parent=1 // pred_fallthru
      _
    // Predicated region
    $region22: #{tpu_custom_call.1} parent=1 // pred_check
      _
    $region23: #{tpu_custom_call.1} parent=1 // pred_check_branch
      %79 = sbr.rel (0) target = $region25
    $region24: #{tpu_custom_call.1} parent=1 // pred_region
      %81 = vsyncadd [#allocation12], 0
      %s82 = sshll.u32 %s5, 4
      %s83 = int_to_ptr.hbm [resolvable:$true] %s82
      %s84 = sshll.u32 [#allocation11], 4
      %s85 = int_to_ptr.vmem [resolvable:$true] %s84
      %90 = dma.hbm_to_vmem [thread:$0]  %s83, 7680, %s85, [#allocation12], 64, 64, 4
    $region25: #{tpu_custom_call.1} parent=1 // pred_fallthru
      _
    // Predicated region
    $region26: #{tpu_custom_call.1} parent=1 // pred_check
      _
    $region27: #{tpu_custom_call.1} parent=1 // pred_check_branch
      %92 = sbr.rel (0) target = $region29
    $region28: #{tpu_custom_call.1} parent=1 // pred_region
      _
    $region29: #{tpu_custom_call.1} parent=1 // pred_fallthru
      _
    // Predicated region
    $region30: #{tpu_custom_call.1} parent=1 // pred_check
      _
    $region31: #{tpu_custom_call.1} parent=1 // pred_check_branch
      %94 = sbr.rel (0) target = $region33
    $region32: #{tpu_custom_call.1} parent=1 // pred_region
      %96 = vsyncadd [#allocation12], 0
      %s97 = sshll.u32 %s7, 4
      %s98 = int_to_ptr.hbm [resolvable:$true] %s97
      %s99 = sshll.u32 [#allocation13], 4
      %s100 = int_to_ptr.vmem [resolvable:$true] %s99
      %105 = dma.hbm_to_vmem [thread:$0]  %s98, 1024, %s100, [#allocation12], 64, 64, 4
    $region33: #{tpu_custom_call.1} parent=1 // pred_fallthru
      _
    // Predicated region
    $region34: #{tpu_custom_call.1} parent=1 // pred_check
      _
    $region35: #{tpu_custom_call.1} parent=1 // pred_check_branch
      %107 = sbr.rel (0) target = $region37
    $region36: #{tpu_custom_call.1} parent=1 // pred_region
      _
    $region37: #{tpu_custom_call.1} parent=1 // pred_fallthru
      _
    // Predicated region
    $region38: #{tpu_custom_call.1} parent=1 // pred_check
      _
    $region39: #{tpu_custom_call.1} parent=1 // pred_check_branch
      %109 = sbr.rel (0) target = $region41
    $region40: #{tpu_custom_call.1} parent=1 // pred_region
      %111 = dma.done [#allocation3], 64
    $region41: #{tpu_custom_call.1} parent=1 // pred_fallthru
      _
    // Predicated region
    $region42: #{tpu_custom_call.1} parent=1 // pred_check
      _
    $region43: #{tpu_custom_call.1} parent=1 // pred_check_branch
      %113 = sbr.rel (0) target = $region45
    $region44: #{tpu_custom_call.1} parent=1 // pred_region
      %115 = dma.done [#allocation6], 512
    $region45: #{tpu_custom_call.1} parent=1 // pred_fallthru
      _
    // Predicated region
    $region46: #{tpu_custom_call.1} parent=1 // pred_check
      _
    $region47: #{tpu_custom_call.1} parent=1 // pred_check_branch
      %117 = sbr.rel (0) target = $region49
    $region48: #{tpu_custom_call.1} parent=1 // pred_region
      %119 = dma.done [#allocation6], 64
    $region49: #{tpu_custom_call.1} parent=1 // pred_fallthru
      _
    // Predicated region
    $region50: #{tpu_custom_call.1} parent=1 // pred_check
      _
    $region51: #{tpu_custom_call.1} parent=1 // pred_check_branch
      %121 = sbr.rel (0) target = $region53
    $region52: #{tpu_custom_call.1} parent=1 // pred_region
      %123 = dma.done [#allocation9], 30720
    $region53: #{tpu_custom_call.1} parent=1 // pred_fallthru
      _
    // Predicated region
    $region54: #{tpu_custom_call.1} parent=1 // pred_check
      _
    $region55: #{tpu_custom_call.1} parent=1 // pred_check_branch
      %125 = sbr.rel (0) target = $region57
    $region56: #{tpu_custom_call.1} parent=1 // pred_region
      %127 = dma.done [#allocation9], 128
    $region57: #{tpu_custom_call.1} parent=1 // pred_fallthru
      _
    // Predicated region
    $region58: #{tpu_custom_call.1} parent=1 // pred_check
      _
    $region59: #{tpu_custom_call.1} parent=1 // pred_check_branch
      %129 = sbr.rel (0) target = $region61
    $region60: #{tpu_custom_call.1} parent=1 // pred_region
      %131 = dma.done [#allocation12], 7680
    $region61: #{tpu_custom_call.1} parent=1 // pred_fallthru
      _
    // Predicated region
    $region62: #{tpu_custom_call.1} parent=1 // pred_check
      _
    $region63: #{tpu_custom_call.1} parent=1 // pred_check_branch
      %133 = sbr.rel (0) target = $region65
    $region64: #{tpu_custom_call.1} parent=1 // pred_region
      %135 = dma.done [#allocation12], 1024
    $region65: #{tpu_custom_call.1} parent=1 // pred_fallthru
      _
    %v137 = vld [vmem:[#allocation2] sm:$0xf]
    %v138 = vld [vmem:[#allocation5] sm:$0xff]
    %v139 = vld [vmem:[#allocation5 + $0x8] sm:$0xff]
    %v140 = vld [vmem:[#allocation5 + $0x10] sm:$0xff]
    %v141 = vld [vmem:[#allocation5 + $0x18] sm:$0xff]
    %v142 = vld [vmem:[#allocation7] sm:$0xf]
    %v144 = vperm.slane %v142, 0
    %v145 = vperm.slane %v142, 1
    %v146 = vperm.slane %v142, 2
    %v147 = vperm.slane %v142, 3
    %v156 = vunpack.c.l.b16 %v138
    %v157 = vunpack.c.h.b16 %v138
    %v158 = vunpack.c.l.b16 %v139
    %v159 = vunpack.c.h.b16 %v139
    %v160 = vunpack.c.l.b16 %v140
    %v161 = vunpack.c.h.b16 %v140
    %v162 = vunpack.c.l.b16 %v141
    %v163 = vunpack.c.h.b16 %v141
    %v164 = vpack.c.b16 %v160, %v156
    %v165 = vpack.c.b16 %v161, %v157
    %v166 = vpack.c.b16 %v162, %v158
    %v167 = vpack.c.b16 %v163, %v159
    %vm168 = vcmask 121856
    %v170 = vsel %vm168, %v137, 0
    %vm172 = vcmask 1046528
    %vm173 = vcmask 1047552
    %v174 = vsel %vm172, 4294967295, 65535
    %v175 = vsel %vm173, %v174, 0
    %v177 = vand.u32 %v164, %v175
    %v180 = vand.u32 %v165, %v175
    %v183 = vand.u32 %v166, %v175
    %v186 = vand.u32 %v167, %v175
    %188 = vmatpush.bf16.msra.mxu0 0
    %189 = vmatpush.bf16.msra.mxu0 0
    %190 = vmatpush.bf16.msra.mxu0 0
    %191 = vmatpush.bf16.msra.mxu0 0
    %192 = vmatpush.bf16.msra.mxu0 0
    %193 = vmatpush.bf16.msra.mxu0 0
    %194 = vmatpush.bf16.msra.mxu0 0
    %195 = vmatpush.bf16.msra.mxu0 %v177
    %196 = vmatmul.bf16.gmra.mxu0 %v170
    %v197 = vpop.f32.mrf.mxu0
    %v198 = vadd.f32 %v144, %v197
    %v199 = vpop.f32.mrf.mxu0
    %200 = vdwg.mxu0
    %201 = vmatpush.bf16.msra.mxu0 0
    %202 = vmatpush.bf16.msra.mxu0 0
    %203 = vmatpush.bf16.msra.mxu0 0
    %204 = vmatpush.bf16.msra.mxu0 0
    %205 = vmatpush.bf16.msra.mxu0 0
    %206 = vmatpush.bf16.msra.mxu0 0
    %207 = vmatpush.bf16.msra.mxu0 0
    %208 = vmatpush.bf16.msra.mxu0 %v180
    %209 = vmatmul.bf16.gmra.mxu0 %v170
    %v210 = vpop.f32.mrf.mxu0
    %v211 = vadd.f32 %v145, %v210
    %v212 = vpop.f32.mrf.mxu0
    %213 = vdwg.mxu0
    %214 = vmatpush.bf16.msra.mxu0 0
    %215 = vmatpush.bf16.msra.mxu0 0
    %216 = vmatpush.bf16.msra.mxu0 0
    %217 = vmatpush.bf16.msra.mxu0 0
    %218 = vmatpush.bf16.msra.mxu0 0
    %219 = vmatpush.bf16.msra.mxu0 0
    %220 = vmatpush.bf16.msra.mxu0 0
    %221 = vmatpush.bf16.msra.mxu0 %v183
    %222 = vmatmul.bf16.gmra.mxu0 %v170
    %v223 = vpop.f32.mrf.mxu0
    %v224 = vadd.f32 %v146, %v223
    %v225 = vpop.f32.mrf.mxu0
    %226 = vdwg.mxu0
    %227 = vmatpush.bf16.msra.mxu0 0
    %228 = vmatpush.bf16.msra.mxu0 0
    %229 = vmatpush.bf16.msra.mxu0 0
    %230 = vmatpush.bf16.msra.mxu0 0
    %231 = vmatpush.bf16.msra.mxu0 0
    %232 = vmatpush.bf16.msra.mxu0 0
    %233 = vmatpush.bf16.msra.mxu0 0
    %234 = vmatpush.bf16.msra.mxu0 %v186
    %235 = vmatmul.bf16.gmra.mxu0 %v170
    %v236 = vpop.f32.mrf.mxu0
    %v237 = vadd.f32 %v147, %v236
    %v238 = vpop.f32.mrf.mxu0
    %239 = vdwg.mxu0
    %v240 = vmax.f32 %v198, 0.0
    %v241 = vmax.f32 %v211, 0.0
    %v242 = vmax.f32 %v224, 0.0
    %v243 = vmax.f32 %v237, 0.0
    %v244 = vpack.c.bf16 %v240, %v240
    %v245 = vpack.c.bf16 %v241, %v241
    %v246 = vpack.c.bf16 %v242, %v242
    %v247 = vpack.c.bf16 %v243, %v243
    %v248 = vld [vmem:[#allocation8] sm:$0xff]
    %v249 = vld [vmem:[#allocation8 + $0x8] sm:$0xff]
    %v250 = vld [vmem:[#allocation8 + $0x10] sm:$0xff]
    %v251 = vld [vmem:[#allocation8 + $0x18] sm:$0xff]
    %v252 = vld [vmem:[#allocation8 + $0x20] sm:$0xff]
    %v253 = vld [vmem:[#allocation8 + $0x28] sm:$0xff]
    %v254 = vld [vmem:[#allocation8 + $0x30] sm:$0xff]
    %v255 = vld [vmem:[#allocation8 + $0x38] sm:$0xff]
    %v256 = vld [vmem:[#allocation8 + $0x40] sm:$0xff]
    %v257 = vld [vmem:[#allocation8 + $0x48] sm:$0xff]
    %v258 = vld [vmem:[#allocation8 + $0x50] sm:$0xff]
    %v259 = vld [vmem:[#allocation8 + $0x58] sm:$0xff]
    %v260 = vld [vmem:[#allocation8 + $0x60] sm:$0xff]
    %v261 = vld [vmem:[#allocation8 + $0x68] sm:$0xff]
    %v262 = vld [vmem:[#allocation8 + $0x70] sm:$0xff]
    %v263 = vld [vmem:[#allocation8 + $0x78] sm:$0xff]
    %v264 = vld [vmem:[#allocation8 + $0x80] sm:$0xff]
    %v265 = vld [vmem:[#allocation8 + $0x88] sm:$0xff]
    %v266 = vld [vmem:[#allocation8 + $0x90] sm:$0xff]
    %v267 = vld [vmem:[#allocation8 + $0x98] sm:$0xff]
    %v268 = vld [vmem:[#allocation8 + $0xa0] sm:$0xff]
    %v269 = vld [vmem:[#allocation8 + $0xa8] sm:$0xff]
    %v270 = vld [vmem:[#allocation8 + $0xb0] sm:$0xff]
    %v271 = vld [vmem:[#allocation8 + $0xb8] sm:$0xff]
    %v272 = vld [vmem:[#allocation8 + $0xc0] sm:$0xff]
    %v273 = vld [vmem:[#allocation8 + $0xc8] sm:$0xff]
    %v274 = vld [vmem:[#allocation8 + $0xd0] sm:$0xff]
    %v275 = vld [vmem:[#allocation8 + $0xd8] sm:$0xff]
    %v276 = vld [vmem:[#allocation8 + $0xe0] sm:$0xff]
    %v277 = vld [vmem:[#allocation8 + $0xe8] sm:$0xff]
    %v278 = vld [vmem:[#allocation8 + $0xf0] sm:$0xff]
    %v279 = vld [vmem:[#allocation8 + $0xf8] sm:$0xff]
    %v280 = vld [vmem:[#allocation8 + $0x100] sm:$0xff]
    %v281 = vld [vmem:[#allocation8 + $0x108] sm:$0xff]
    %v282 = vld [vmem:[#allocation8 + $0x110] sm:$0xff]
    %v283 = vld [vmem:[#allocation8 + $0x118] sm:$0xff]
    %v284 = vld [vmem:[#allocation8 + $0x120] sm:$0xff]
    %v285 = vld [vmem:[#allocation8 + $0x128] sm:$0xff]
    %v286 = vld [vmem:[#allocation8 + $0x130] sm:$0xff]
    %v287 = vld [vmem:[#allocation8 + $0x138] sm:$0xff]
    %v288 = vld [vmem:[#allocation8 + $0x140] sm:$0xff]
    %v289 = vld [vmem:[#allocation8 + $0x148] sm:$0xff]
    %v290 = vld [vmem:[#allocation8 + $0x150] sm:$0xff]
    %v291 = vld [vmem:[#allocation8 + $0x158] sm:$0xff]
    %v292 = vld [vmem:[#allocation8 + $0x160] sm:$0xff]
    %v293 = vld [vmem:[#allocation8 + $0x168] sm:$0xff]
    %v294 = vld [vmem:[#allocation8 + $0x170] sm:$0xff]
    %v295 = vld [vmem:[#allocation8 + $0x178] sm:$0xff]
    %v296 = vld [vmem:[#allocation8 + $0x180] sm:$0xff]
    %v297 = vld [vmem:[#allocation8 + $0x188] sm:$0xff]
    %v298 = vld [vmem:[#allocation8 + $0x190] sm:$0xff]
    %v299 = vld [vmem:[#allocation8 + $0x198] sm:$0xff]
    %v300 = vld [vmem:[#allocation8 + $0x1a0] sm:$0xff]
    %v301 = vld [vmem:[#allocation8 + $0x1a8] sm:$0xff]
    %v302 = vld [vmem:[#allocation8 + $0x1b0] sm:$0xff]
    %v303 = vld [vmem:[#allocation8 + $0x1b8] sm:$0xff]
    %v304 = vld [vmem:[#allocation8 + $0x1c0] sm:$0xff]
    %v305 = vld [vmem:[#allocation8 + $0x1c8] sm:$0xff]
    %v306 = vld [vmem:[#allocation8 + $0x1d0] sm:$0xff]
    %v307 = vld [vmem:[#allocation8 + $0x1d8] sm:$0xff]
    %v308 = vld [vmem:[#allocation8 + $0x1e0] sm:$0xff]
    %v309 = vld [vmem:[#allocation8 + $0x1e8] sm:$0xff]
    %v310 = vld [vmem:[#allocation8 + $0x1f0] sm:$0xff]
    %v311 = vld [vmem:[#allocation8 + $0x1f8] sm:$0xff]
    %v312 = vld [vmem:[#allocation8 + $0x200] sm:$0xff]
    %v313 = vld [vmem:[#allocation8 + $0x208] sm:$0xff]
    %v314 = vld [vmem:[#allocation8 + $0x210] sm:$0xff]
    %v315 = vld [vmem:[#allocation8 + $0x218] sm:$0xff]
    %v316 = vld [vmem:[#allocation8 + $0x220] sm:$0xff]
    %v317 = vld [vmem:[#allocation8 + $0x228] sm:$0xff]
    %v318 = vld [vmem:[#allocation8 + $0x230] sm:$0xff]
    %v319 = vld [vmem:[#allocation8 + $0x238] sm:$0xff]
    %v320 = vld [vmem:[#allocation8 + $0x240] sm:$0xff]
    %v321 = vld [vmem:[#allocation8 + $0x248] sm:$0xff]
    %v322 = vld [vmem:[#allocation8 + $0x250] sm:$0xff]
    %v323 = vld [vmem:[#allocation8 + $0x258] sm:$0xff]
    %v324 = vld [vmem:[#allocation8 + $0x260] sm:$0xff]
    %v325 = vld [vmem:[#allocation8 + $0x268] sm:$0xff]
    %v326 = vld [vmem:[#allocation8 + $0x270] sm:$0xff]
    %v327 = vld [vmem:[#allocation8 + $0x278] sm:$0xff]
    %v328 = vld [vmem:[#allocation8 + $0x280] sm:$0xff]
    %v329 = vld [vmem:[#allocation8 + $0x288] sm:$0xff]
    %v330 = vld [vmem:[#allocation8 + $0x290] sm:$0xff]
    %v331 = vld [vmem:[#allocation8 + $0x298] sm:$0xff]
    %v332 = vld [vmem:[#allocation8 + $0x2a0] sm:$0xff]
    %v333 = vld [vmem:[#allocation8 + $0x2a8] sm:$0xff]
    %v334 = vld [vmem:[#allocation8 + $0x2b0] sm:$0xff]
    %v335 = vld [vmem:[#allocation8 + $0x2b8] sm:$0xff]
    %v336 = vld [vmem:[#allocation8 + $0x2c0] sm:$0xff]
    %v337 = vld [vmem:[#allocation8 + $0x2c8] sm:$0xff]
    %v338 = vld [vmem:[#allocation8 + $0x2d0] sm:$0xff]
    %v339 = vld [vmem:[#allocation8 + $0x2d8] sm:$0xff]
    %v340 = vld [vmem:[#allocation8 + $0x2e0] sm:$0xff]
    %v341 = vld [vmem:[#allocation8 + $0x2e8] sm:$0xff]
    %v342 = vld [vmem:[#allocation8 + $0x2f0] sm:$0xff]
    %v343 = vld [vmem:[#allocation8 + $0x2f8] sm:$0xff]
    %v344 = vld [vmem:[#allocation8 + $0x300] sm:$0xff]
    %v345 = vld [vmem:[#allocation8 + $0x308] sm:$0xff]
    %v346 = vld [vmem:[#allocation8 + $0x310] sm:$0xff]
    %v347 = vld [vmem:[#allocation8 + $0x318] sm:$0xff]
    %v348 = vld [vmem:[#allocation8 + $0x320] sm:$0xff]
    %v349 = vld [vmem:[#allocation8 + $0x328] sm:$0xff]
    %v350 = vld [vmem:[#allocation8 + $0x330] sm:$0xff]
    %v351 = vld [vmem:[#allocation8 + $0x338] sm:$0xff]
    %v352 = vld [vmem:[#allocation8 + $0x340] sm:$0xff]
    %v353 = vld [vmem:[#allocation8 + $0x348] sm:$0xff]
    %v354 = vld [vmem:[#allocation8 + $0x350] sm:$0xff]
    %v355 = vld [vmem:[#allocation8 + $0x358] sm:$0xff]
    %v356 = vld [vmem:[#allocation8 + $0x360] sm:$0xff]
    %v357 = vld [vmem:[#allocation8 + $0x368] sm:$0xff]
    %v358 = vld [vmem:[#allocation8 + $0x370] sm:$0xff]
    %v359 = vld [vmem:[#allocation8 + $0x378] sm:$0xff]
    %v360 = vld [vmem:[#allocation8 + $0x380] sm:$0xff]
    %v361 = vld [vmem:[#allocation8 + $0x388] sm:$0xff]
    %v362 = vld [vmem:[#allocation8 + $0x390] sm:$0xff]
    %v363 = vld [vmem:[#allocation8 + $0x398] sm:$0xff]
    %v364 = vld [vmem:[#allocation8 + $0x3a0] sm:$0xff]
    %v365 = vld [vmem:[#allocation8 + $0x3a8] sm:$0xff]
    %v366 = vld [vmem:[#allocation8 + $0x3b0] sm:$0xff]
    %v367 = vld [vmem:[#allocation8 + $0x3b8] sm:$0xff]
    %v368 = vld [vmem:[#allocation8 + $0x3c0] sm:$0xff]
    %v369 = vld [vmem:[#allocation8 + $0x3c8] sm:$0xff]
    %v370 = vld [vmem:[#allocation8 + $0x3d0] sm:$0xff]
    %v371 = vld [vmem:[#allocation8 + $0x3d8] sm:$0xff]
    %v372 = vld [vmem:[#allocation8 + $0x3e0] sm:$0xff]
    %v373 = vld [vmem:[#allocation8 + $0x3e8] sm:$0xff]
    %v374 = vld [vmem:[#allocation8 + $0x3f0] sm:$0xff]
    %v375 = vld [vmem:[#allocation8 + $0x3f8] sm:$0xff]
    %v376 = vld [vmem:[#allocation8 + $0x400] sm:$0xff]
    %v377 = vld [vmem:[#allocation8 + $0x408] sm:$0xff]
    %v378 = vld [vmem:[#allocation8 + $0x410] sm:$0xff]
    %v379 = vld [vmem:[#allocation8 + $0x418] sm:$0xff]
    %v380 = vld [vmem:[#allocation8 + $0x420] sm:$0xff]
    %v381 = vld [vmem:[#allocation8 + $0x428] sm:$0xff]
    %v382 = vld [vmem:[#allocation8 + $0x430] sm:$0xff]
    %v383 = vld [vmem:[#allocation8 + $0x438] sm:$0xff]
    %v384 = vld [vmem:[#allocation8 + $0x440] sm:$0xff]
    %v385 = vld [vmem:[#allocation8 + $0x448] sm:$0xff]
    %v386 = vld [vmem:[#allocation8 + $0x450] sm:$0xff]
    %v387 = vld [vmem:[#allocation8 + $0x458] sm:$0xff]
    %v388 = vld [vmem:[#allocation8 + $0x460] sm:$0xff]
    %v389 = vld [vmem:[#allocation8 + $0x468] sm:$0xff]
    %v390 = vld [vmem:[#allocation8 + $0x470] sm:$0xff]
    %v391 = vld [vmem:[#allocation8 + $0x478] sm:$0xff]
    %v392 = vld [vmem:[#allocation8 + $0x480] sm:$0xff]
    %v393 = vld [vmem:[#allocation8 + $0x488] sm:$0xff]
    %v394 = vld [vmem:[#allocation8 + $0x490] sm:$0xff]
    %v395 = vld [vmem:[#allocation8 + $0x498] sm:$0xff]
    %v396 = vld [vmem:[#allocation8 + $0x4a0] sm:$0xff]
    %v397 = vld [vmem:[#allocation8 + $0x4a8] sm:$0xff]
    %v398 = vld [vmem:[#allocation8 + $0x4b0] sm:$0xff]
    %v399 = vld [vmem:[#allocation8 + $0x4b8] sm:$0xff]
    %v400 = vld [vmem:[#allocation8 + $0x4c0] sm:$0xff]
    %v401 = vld [vmem:[#allocation8 + $0x4c8] sm:$0xff]
    %v402 = vld [vmem:[#allocation8 + $0x4d0] sm:$0xff]
    %v403 = vld [vmem:[#allocation8 + $0x4d8] sm:$0xff]
    %v404 = vld [vmem:[#allocation8 + $0x4e0] sm:$0xff]
    %v405 = vld [vmem:[#allocation8 + $0x4e8] sm:$0xff]
    %v406 = vld [vmem:[#allocation8 + $0x4f0] sm:$0xff]
    %v407 = vld [vmem:[#allocation8 + $0x4f8] sm:$0xff]
    %v408 = vld [vmem:[#allocation8 + $0x500] sm:$0xff]
    %v409 = vld [vmem:[#allocation8 + $0x508] sm:$0xff]
    %v410 = vld [vmem:[#allocation8 + $0x510] sm:$0xff]
    %v411 = vld [vmem:[#allocation8 + $0x518] sm:$0xff]
    %v412 = vld [vmem:[#allocation8 + $0x520] sm:$0xff]
    %v413 = vld [vmem:[#allocation8 + $0x528] sm:$0xff]
    %v414 = vld [vmem:[#allocation8 + $0x530] sm:$0xff]
    %v415 = vld [vmem:[#allocation8 + $0x538] sm:$0xff]
    %v416 = vld [vmem:[#allocation8 + $0x540] sm:$0xff]
    %v417 = vld [vmem:[#allocation8 + $0x548] sm:$0xff]
    %v418 = vld [vmem:[#allocation8 + $0x550] sm:$0xff]
    %v419 = vld [vmem:[#allocation8 + $0x558] sm:$0xff]
    %v420 = vld [vmem:[#allocation8 + $0x560] sm:$0xff]
    %v421 = vld [vmem:[#allocation8 + $0x568] sm:$0xff]
    %v422 = vld [vmem:[#allocation8 + $0x570] sm:$0xff]
    %v423 = vld [vmem:[#allocation8 + $0x578] sm:$0xff]
    %v424 = vld [vmem:[#allocation8 + $0x580] sm:$0xff]
    %v425 = vld [vmem:[#allocation8 + $0x588] sm:$0xff]
    %v426 = vld [vmem:[#allocation8 + $0x590] sm:$0xff]
    %v427 = vld [vmem:[#allocation8 + $0x598] sm:$0xff]
    %v428 = vld [vmem:[#allocation8 + $0x5a0] sm:$0xff]
    %v429 = vld [vmem:[#allocation8 + $0x5a8] sm:$0xff]
    %v430 = vld [vmem:[#allocation8 + $0x5b0] sm:$0xff]
    %v431 = vld [vmem:[#allocation8 + $0x5b8] sm:$0xff]
    %v432 = vld [vmem:[#allocation8 + $0x5c0] sm:$0xff]
    %v433 = vld [vmem:[#allocation8 + $0x5c8] sm:$0xff]
    %v434 = vld [vmem:[#allocation8 + $0x5d0] sm:$0xff]
    %v435 = vld [vmem:[#allocation8 + $0x5d8] sm:$0xff]
    %v436 = vld [vmem:[#allocation8 + $0x5e0] sm:$0xff]
    %v437 = vld [vmem:[#allocation8 + $0x5e8] sm:$0xff]
    %v438 = vld [vmem:[#allocation8 + $0x5f0] sm:$0xff]
    %v439 = vld [vmem:[#allocation8 + $0x5f8] sm:$0xff]
    %v440 = vld [vmem:[#allocation8 + $0x600] sm:$0xff]
    %v441 = vld [vmem:[#allocation8 + $0x608] sm:$0xff]
    %v442 = vld [vmem:[#allocation8 + $0x610] sm:$0xff]
    %v443 = vld [vmem:[#allocation8 + $0x618] sm:$0xff]
    %v444 = vld [vmem:[#allocation8 + $0x620] sm:$0xff]
    %v445 = vld [vmem:[#allocation8 + $0x628] sm:$0xff]
    %v446 = vld [vmem:[#allocation8 + $0x630] sm:$0xff]
    %v447 = vld [vmem:[#allocation8 + $0x638] sm:$0xff]
    %v448 = vld [vmem:[#allocation8 + $0x640] sm:$0xff]
    %v449 = vld [vmem:[#allocation8 + $0x648] sm:$0xff]
    %v450 = vld [vmem:[#allocation8 + $0x650] sm:$0xff]
    %v451 = vld [vmem:[#allocation8 + $0x658] sm:$0xff]
    %v452 = vld [vmem:[#allocation8 + $0x660] sm:$0xff]
    %v453 = vld [vmem:[#allocation8 + $0x668] sm:$0xff]
    %v454 = vld [vmem:[#allocation8 + $0x670] sm:$0xff]
    %v455 = vld [vmem:[#allocation8 + $0x678] sm:$0xff]
    %v456 = vld [vmem:[#allocation8 + $0x680] sm:$0xff]
    %v457 = vld [vmem:[#allocation8 + $0x688] sm:$0xff]
    %v458 = vld [vmem:[#allocation8 + $0x690] sm:$0xff]
    %v459 = vld [vmem:[#allocation8 + $0x698] sm:$0xff]
    %v460 = vld [vmem:[#allocation8 + $0x6a0] sm:$0xff]
    %v461 = vld [vmem:[#allocation8 + $0x6a8] sm:$0xff]
    %v462 = vld [vmem:[#allocation8 + $0x6b0] sm:$0xff]
    %v463 = vld [vmem:[#allocation8 + $0x6b8] sm:$0xff]
    %v464 = vld [vmem:[#allocation8 + $0x6c0] sm:$0xff]
    %v465 = vld [vmem:[#allocation8 + $0x6c8] sm:$0xff]
    %v466 = vld [vmem:[#allocation8 + $0x6d0] sm:$0xff]
    %v467 = vld [vmem:[#allocation8 + $0x6d8] sm:$0xff]
    %v468 = vld [vmem:[#allocation8 + $0x6e0] sm:$0xff]
    %v469 = vld [vmem:[#allocation8 + $0x6e8] sm:$0xff]
    %v470 = vld [vmem:[#allocation8 + $0x6f0] sm:$0xff]
    %v471 = vld [vmem:[#allocation8 + $0x6f8] sm:$0xff]
    %v472 = vld [vmem:[#allocation8 + $0x700] sm:$0xff]
    %v473 = vld [vmem:[#allocation8 + $0x708] sm:$0xff]
    %v474 = vld [vmem:[#allocation8 + $0x710] sm:$0xff]
    %v475 = vld [vmem:[#allocation8 + $0x718] sm:$0xff]
    %v476 = vld [vmem:[#allocation8 + $0x720] sm:$0xff]
    %v477 = vld [vmem:[#allocation8 + $0x728] sm:$0xff]
    %v478 = vld [vmem:[#allocation8 + $0x730] sm:$0xff]
    %v479 = vld [vmem:[#allocation8 + $0x738] sm:$0xff]
    %v480 = vld [vmem:[#allocation8 + $0x740] sm:$0xff]
    %v481 = vld [vmem:[#allocation8 + $0x748] sm:$0xff]
    %v482 = vld [vmem:[#allocation8 + $0x750] sm:$0xff]
    %v483 = vld [vmem:[#allocation8 + $0x758] sm:$0xff]
    %v484 = vld [vmem:[#allocation8 + $0x760] sm:$0xff]
    %v485 = vld [vmem:[#allocation8 + $0x768] sm:$0xff]
    %v486 = vld [vmem:[#allocation8 + $0x770] sm:$0xff]
    %v487 = vld [vmem:[#allocation8 + $0x778] sm:$0xff]
    %v488 = vld [vmem:[#allocation10] sm:$0xff]
    %v490 = vperm.slane %v488, 0
    %v491 = vperm.slane %v488, 1
    %v492 = vperm.slane %v488, 2
    %v493 = vperm.slane %v488, 3
    %v494 = vperm.slane %v488, 4
    %v495 = vperm.slane %v488, 5
    %v496 = vperm.slane %v488, 6
    %v497 = vperm.slane %v488, 7
    %v746 = vunpack.c.l.b16 %v248
    %v747 = vunpack.c.h.b16 %v248
    %v748 = vunpack.c.l.b16 %v249
    %v749 = vunpack.c.h.b16 %v249
    %v750 = vunpack.c.l.b16 %v250
    %v751 = vunpack.c.h.b16 %v250
    %v752 = vunpack.c.l.b16 %v251
    %v753 = vunpack.c.h.b16 %v251
    %v754 = vunpack.c.l.b16 %v252
    %v755 = vunpack.c.h.b16 %v252
    %v756 = vunpack.c.l.b16 %v253
    %v757 = vunpack.c.h.b16 %v253
    %v758 = vunpack.c.l.b16 %v254
    %v759 = vunpack.c.h.b16 %v254
    %v760 = vunpack.c.l.b16 %v255
    %v761 = vunpack.c.h.b16 %v255
    %v762 = vunpack.c.l.b16 %v256
    %v763 = vunpack.c.h.b16 %v256
    %v764 = vunpack.c.l.b16 %v257
    %v765 = vunpack.c.h.b16 %v257
    %v766 = vunpack.c.l.b16 %v258
    %v767 = vunpack.c.h.b16 %v258
    %v768 = vunpack.c.l.b16 %v259
    %v769 = vunpack.c.h.b16 %v259
    %v770 = vunpack.c.l.b16 %v260
    %v771 = vunpack.c.h.b16 %v260
    %v772 = vunpack.c.l.b16 %v261
    %v773 = vunpack.c.h.b16 %v261
    %v774 = vunpack.c.l.b16 %v262
    %v775 = vunpack.c.h.b16 %v262
    %v776 = vunpack.c.l.b16 %v263
    %v777 = vunpack.c.h.b16 %v263
    %v778 = vunpack.c.l.b16 %v264
    %v779 = vunpack.c.h.b16 %v264
    %v780 = vunpack.c.l.b16 %v265
    %v781 = vunpack.c.h.b16 %v265
    %v782 = vunpack.c.l.b16 %v266
    %v783 = vunpack.c.h.b16 %v266
    %v784 = vunpack.c.l.b16 %v267
    %v785 = vunpack.c.h.b16 %v267
    %v786 = vunpack.c.l.b16 %v268
    %v787 = vunpack.c.h.b16 %v268
    %v788 = vunpack.c.l.b16 %v269
    %v789 = vunpack.c.h.b16 %v269
    %v790 = vunpack.c.l.b16 %v270
    %v791 = vunpack.c.h.b16 %v270
    %v792 = vunpack.c.l.b16 %v271
    %v793 = vunpack.c.h.b16 %v271
    %v794 = vunpack.c.l.b16 %v272
    %v795 = vunpack.c.h.b16 %v272
    %v796 = vunpack.c.l.b16 %v273
    %v797 = vunpack.c.h.b16 %v273
    %v798 = vunpack.c.l.b16 %v274
    %v799 = vunpack.c.h.b16 %v274
    %v800 = vunpack.c.l.b16 %v275
    %v801 = vunpack.c.h.b16 %v275
    %v802 = vunpack.c.l.b16 %v276
    %v803 = vunpack.c.h.b16 %v276
    %v804 = vunpack.c.l.b16 %v277
    %v805 = vunpack.c.h.b16 %v277
    %v806 = vunpack.c.l.b16 %v278
    %v807 = vunpack.c.h.b16 %v278
    %v808 = vunpack.c.l.b16 %v279
    %v809 = vunpack.c.h.b16 %v279
    %v810 = vunpack.c.l.b16 %v280
    %v811 = vunpack.c.h.b16 %v280
    %v812 = vunpack.c.l.b16 %v281
    %v813 = vunpack.c.h.b16 %v281
    %v814 = vunpack.c.l.b16 %v282
    %v815 = vunpack.c.h.b16 %v282
    %v816 = vunpack.c.l.b16 %v283
    %v817 = vunpack.c.h.b16 %v283
    %v818 = vunpack.c.l.b16 %v284
    %v819 = vunpack.c.h.b16 %v284
    %v820 = vunpack.c.l.b16 %v285
    %v821 = vunpack.c.h.b16 %v285
    %v822 = vunpack.c.l.b16 %v286
    %v823 = vunpack.c.h.b16 %v286
    %v824 = vunpack.c.l.b16 %v287
    %v825 = vunpack.c.h.b16 %v287
    %v826 = vunpack.c.l.b16 %v288
    %v827 = vunpack.c.h.b16 %v288
    %v828 = vunpack.c.l.b16 %v289
    %v829 = vunpack.c.h.b16 %v289
    %v830 = vunpack.c.l.b16 %v290
    %v831 = vunpack.c.h.b16 %v290
    %v832 = vunpack.c.l.b16 %v291
    %v833 = vunpack.c.h.b16 %v291
    %v834 = vunpack.c.l.b16 %v292
    %v835 = vunpack.c.h.b16 %v292
    %v836 = vunpack.c.l.b16 %v293
    %v837 = vunpack.c.h.b16 %v293
    %v838 = vunpack.c.l.b16 %v294
    %v839 = vunpack.c.h.b16 %v294
    %v840 = vunpack.c.l.b16 %v295
    %v841 = vunpack.c.h.b16 %v295
    %v842 = vunpack.c.l.b16 %v296
    %v843 = vunpack.c.h.b16 %v296
    %v844 = vunpack.c.l.b16 %v297
    %v845 = vunpack.c.h.b16 %v297
    %v846 = vunpack.c.l.b16 %v298
    %v847 = vunpack.c.h.b16 %v298
    %v848 = vunpack.c.l.b16 %v299
    %v849 = vunpack.c.h.b16 %v299
    %v850 = vunpack.c.l.b16 %v300
    %v851 = vunpack.c.h.b16 %v300
    %v852 = vunpack.c.l.b16 %v301
    %v853 = vunpack.c.h.b16 %v301
    %v854 = vunpack.c.l.b16 %v302
    %v855 = vunpack.c.h.b16 %v302
    %v856 = vunpack.c.l.b16 %v303
    %v857 = vunpack.c.h.b16 %v303
    %v858 = vunpack.c.l.b16 %v304
    %v859 = vunpack.c.h.b16 %v304
    %v860 = vunpack.c.l.b16 %v305
    %v861 = vunpack.c.h.b16 %v305
    %v862 = vunpack.c.l.b16 %v306
    %v863 = vunpack.c.h.b16 %v306
    %v864 = vunpack.c.l.b16 %v307
    %v865 = vunpack.c.h.b16 %v307
    %v866 = vunpack.c.l.b16 %v308
    %v867 = vunpack.c.h.b16 %v308
    %v868 = vunpack.c.l.b16 %v309
    %v869 = vunpack.c.h.b16 %v309
    %v870 = vunpack.c.l.b16 %v310
    %v871 = vunpack.c.h.b16 %v310
    %v872 = vunpack.c.l.b16 %v311
    %v873 = vunpack.c.h.b16 %v311
    %v874 = vunpack.c.l.b16 %v312
    %v875 = vunpack.c.h.b16 %v312
    %v876 = vunpack.c.l.b16 %v313
    %v877 = vunpack.c.h.b16 %v313
    %v878 = vunpack.c.l.b16 %v314
    %v879 = vunpack.c.h.b16 %v314
    %v880 = vunpack.c.l.b16 %v315
    %v881 = vunpack.c.h.b16 %v315
    %v882 = vunpack.c.l.b16 %v316
    %v883 = vunpack.c.h.b16 %v316
    %v884 = vunpack.c.l.b16 %v317
    %v885 = vunpack.c.h.b16 %v317
    %v886 = vunpack.c.l.b16 %v318
    %v887 = vunpack.c.h.b16 %v318
    %v888 = vunpack.c.l.b16 %v319
    %v889 = vunpack.c.h.b16 %v319
    %v890 = vunpack.c.l.b16 %v320
    %v891 = vunpack.c.h.b16 %v320
    %v892 = vunpack.c.l.b16 %v321
    %v893 = vunpack.c.h.b16 %v321
    %v894 = vunpack.c.l.b16 %v322
    %v895 = vunpack.c.h.b16 %v322
    %v896 = vunpack.c.l.b16 %v323
    %v897 = vunpack.c.h.b16 %v323
    %v898 = vunpack.c.l.b16 %v324
    %v899 = vunpack.c.h.b16 %v324
    %v900 = vunpack.c.l.b16 %v325
    %v901 = vunpack.c.h.b16 %v325
    %v902 = vunpack.c.l.b16 %v326
    %v903 = vunpack.c.h.b16 %v326
    %v904 = vunpack.c.l.b16 %v327
    %v905 = vunpack.c.h.b16 %v327
    %v906 = vunpack.c.l.b16 %v328
    %v907 = vunpack.c.h.b16 %v328
    %v908 = vunpack.c.l.b16 %v329
    %v909 = vunpack.c.h.b16 %v329
    %v910 = vunpack.c.l.b16 %v330
    %v911 = vunpack.c.h.b16 %v330
    %v912 = vunpack.c.l.b16 %v331
    %v913 = vunpack.c.h.b16 %v331
    %v914 = vunpack.c.l.b16 %v332
    %v915 = vunpack.c.h.b16 %v332
    %v916 = vunpack.c.l.b16 %v333
    %v917 = vunpack.c.h.b16 %v333
    %v918 = vunpack.c.l.b16 %v334
    %v919 = vunpack.c.h.b16 %v334
    %v920 = vunpack.c.l.b16 %v335
    %v921 = vunpack.c.h.b16 %v335
    %v922 = vunpack.c.l.b16 %v336
    %v923 = vunpack.c.h.b16 %v336
    %v924 = vunpack.c.l.b16 %v337
    %v925 = vunpack.c.h.b16 %v337
    %v926 = vunpack.c.l.b16 %v338
    %v927 = vunpack.c.h.b16 %v338
    %v928 = vunpack.c.l.b16 %v339
    %v929 = vunpack.c.h.b16 %v339
    %v930 = vunpack.c.l.b16 %v340
    %v931 = vunpack.c.h.b16 %v340
    %v932 = vunpack.c.l.b16 %v341
    %v933 = vunpack.c.h.b16 %v341
    %v934 = vunpack.c.l.b16 %v342
    %v935 = vunpack.c.h.b16 %v342
    %v936 = vunpack.c.l.b16 %v343
    %v937 = vunpack.c.h.b16 %v343
    %v938 = vunpack.c.l.b16 %v344
    %v939 = vunpack.c.h.b16 %v344
    %v940 = vunpack.c.l.b16 %v345
    %v941 = vunpack.c.h.b16 %v345
    %v942 = vunpack.c.l.b16 %v346
    %v943 = vunpack.c.h.b16 %v346
    %v944 = vunpack.c.l.b16 %v347
    %v945 = vunpack.c.h.b16 %v347
    %v946 = vunpack.c.l.b16 %v348
    %v947 = vunpack.c.h.b16 %v348
    %v948 = vunpack.c.l.b16 %v349
    %v949 = vunpack.c.h.b16 %v349
    %v950 = vunpack.c.l.b16 %v350
    %v951 = vunpack.c.h.b16 %v350
    %v952 = vunpack.c.l.b16 %v351
    %v953 = vunpack.c.h.b16 %v351
    %v954 = vunpack.c.l.b16 %v352
    %v955 = vunpack.c.h.b16 %v352
    %v956 = vunpack.c.l.b16 %v353
    %v957 = vunpack.c.h.b16 %v353
    %v958 = vunpack.c.l.b16 %v354
    %v959 = vunpack.c.h.b16 %v354
    %v960 = vunpack.c.l.b16 %v355
    %v961 = vunpack.c.h.b16 %v355
    %v962 = vunpack.c.l.b16 %v356
    %v963 = vunpack.c.h.b16 %v356
    %v964 = vunpack.c.l.b16 %v357
    %v965 = vunpack.c.h.b16 %v357
    %v966 = vunpack.c.l.b16 %v358
    %v967 = vunpack.c.h.b16 %v358
    %v968 = vunpack.c.l.b16 %v359
    %v969 = vunpack.c.h.b16 %v359
    %v970 = vunpack.c.l.b16 %v360
    %v971 = vunpack.c.h.b16 %v360
    %v972 = vunpack.c.l.b16 %v361
    %v973 = vunpack.c.h.b16 %v361
    %v974 = vunpack.c.l.b16 %v362
    %v975 = vunpack.c.h.b16 %v362
    %v976 = vunpack.c.l.b16 %v363
    %v977 = vunpack.c.h.b16 %v363
    %v978 = vunpack.c.l.b16 %v364
    %v979 = vunpack.c.h.b16 %v364
    %v980 = vunpack.c.l.b16 %v365
    %v981 = vunpack.c.h.b16 %v365
    %v982 = vunpack.c.l.b16 %v366
    %v983 = vunpack.c.h.b16 %v366
    %v984 = vunpack.c.l.b16 %v367
    %v985 = vunpack.c.h.b16 %v367
    %v986 = vunpack.c.l.b16 %v368
    %v987 = vunpack.c.h.b16 %v368
    %v988 = vunpack.c.l.b16 %v369
    %v989 = vunpack.c.h.b16 %v369
    %v990 = vunpack.c.l.b16 %v370
    %v991 = vunpack.c.h.b16 %v370
    %v992 = vunpack.c.l.b16 %v371
    %v993 = vunpack.c.h.b16 %v371
    %v994 = vunpack.c.l.b16 %v372
    %v995 = vunpack.c.h.b16 %v372
    %v996 = vunpack.c.l.b16 %v373
    %v997 = vunpack.c.h.b16 %v373
    %v998 = vunpack.c.l.b16 %v374
    %v999 = vunpack.c.h.b16 %v374
    %v1000 = vunpack.c.l.b16 %v375
    %v1001 = vunpack.c.h.b16 %v375
    %v1002 = vunpack.c.l.b16 %v376
    %v1003 = vunpack.c.h.b16 %v376
    %v1004 = vunpack.c.l.b16 %v377
    %v1005 = vunpack.c.h.b16 %v377
    %v1006 = vunpack.c.l.b16 %v378
    %v1007 = vunpack.c.h.b16 %v378
    %v1008 = vunpack.c.l.b16 %v379
    %v1009 = vunpack.c.h.b16 %v379
    %v1010 = vunpack.c.l.b16 %v380
    %v1011 = vunpack.c.h.b16 %v380
    %v1012 = vunpack.c.l.b16 %v381
    %v1013 = vunpack.c.h.b16 %v381
    %v1014 = vunpack.c.l.b16 %v382
    %v1015 = vunpack.c.h.b16 %v382
    %v1016 = vunpack.c.l.b16 %v383
    %v1017 = vunpack.c.h.b16 %v383
    %v1018 = vunpack.c.l.b16 %v384
    %v1019 = vunpack.c.h.b16 %v384
    %v1020 = vunpack.c.l.b16 %v385
    %v1021 = vunpack.c.h.b16 %v385
    %v1022 = vunpack.c.l.b16 %v386
    %v1023 = vunpack.c.h.b16 %v386
    %v1024 = vunpack.c.l.b16 %v387
    %v1025 = vunpack.c.h.b16 %v387
    %v1026 = vunpack.c.l.b16 %v388
    %v1027 = vunpack.c.h.b16 %v388
    %v1028 = vunpack.c.l.b16 %v389
    %v1029 = vunpack.c.h.b16 %v389
    %v1030 = vunpack.c.l.b16 %v390
    %v1031 = vunpack.c.h.b16 %v390
    %v1032 = vunpack.c.l.b16 %v391
    %v1033 = vunpack.c.h.b16 %v391
    %v1034 = vunpack.c.l.b16 %v392
    %v1035 = vunpack.c.h.b16 %v392
    %v1036 = vunpack.c.l.b16 %v393
    %v1037 = vunpack.c.h.b16 %v393
    %v1038 = vunpack.c.l.b16 %v394
    %v1039 = vunpack.c.h.b16 %v394
    %v1040 = vunpack.c.l.b16 %v395
    %v1041 = vunpack.c.h.b16 %v395
    %v1042 = vunpack.c.l.b16 %v396
    %v1043 = vunpack.c.h.b16 %v396
    %v1044 = vunpack.c.l.b16 %v397
    %v1045 = vunpack.c.h.b16 %v397
    %v1046 = vunpack.c.l.b16 %v398
    %v1047 = vunpack.c.h.b16 %v398
    %v1048 = vunpack.c.l.b16 %v399
    %v1049 = vunpack.c.h.b16 %v399
    %v1050 = vunpack.c.l.b16 %v400
    %v1051 = vunpack.c.h.b16 %v400
    %v1052 = vunpack.c.l.b16 %v401
    %v1053 = vunpack.c.h.b16 %v401
    %v1054 = vunpack.c.l.b16 %v402
    %v1055 = vunpack.c.h.b16 %v402
    %v1056 = vunpack.c.l.b16 %v403
    %v1057 = vunpack.c.h.b16 %v403
    %v1058 = vunpack.c.l.b16 %v404
    %v1059 = vunpack.c.h.b16 %v404
    %v1060 = vunpack.c.l.b16 %v405
    %v1061 = vunpack.c.h.b16 %v405
    %v1062 = vunpack.c.l.b16 %v406
    %v1063 = vunpack.c.h.b16 %v406
    %v1064 = vunpack.c.l.b16 %v407
    %v1065 = vunpack.c.h.b16 %v407
    %v1066 = vunpack.c.l.b16 %v408
    %v1067 = vunpack.c.h.b16 %v408
    %v1068 = vunpack.c.l.b16 %v409
    %v1069 = vunpack.c.h.b16 %v409
    %v1070 = vunpack.c.l.b16 %v410
    %v1071 = vunpack.c.h.b16 %v410
    %v1072 = vunpack.c.l.b16 %v411
    %v1073 = vunpack.c.h.b16 %v411
    %v1074 = vunpack.c.l.b16 %v412
    %v1075 = vunpack.c.h.b16 %v412
    %v1076 = vunpack.c.l.b16 %v413
    %v1077 = vunpack.c.h.b16 %v413
    %v1078 = vunpack.c.l.b16 %v414
    %v1079 = vunpack.c.h.b16 %v414
    %v1080 = vunpack.c.l.b16 %v415
    %v1081 = vunpack.c.h.b16 %v415
    %v1082 = vunpack.c.l.b16 %v416
    %v1083 = vunpack.c.h.b16 %v416
    %v1084 = vunpack.c.l.b16 %v417
    %v1085 = vunpack.c.h.b16 %v417
    %v1086 = vunpack.c.l.b16 %v418
    %v1087 = vunpack.c.h.b16 %v418
    %v1088 = vunpack.c.l.b16 %v419
    %v1089 = vunpack.c.h.b16 %v419
    %v1090 = vunpack.c.l.b16 %v420
    %v1091 = vunpack.c.h.b16 %v420
    %v1092 = vunpack.c.l.b16 %v421
    %v1093 = vunpack.c.h.b16 %v421
    %v1094 = vunpack.c.l.b16 %v422
    %v1095 = vunpack.c.h.b16 %v422
    %v1096 = vunpack.c.l.b16 %v423
    %v1097 = vunpack.c.h.b16 %v423
    %v1098 = vunpack.c.l.b16 %v424
    %v1099 = vunpack.c.h.b16 %v424
    %v1100 = vunpack.c.l.b16 %v425
    %v1101 = vunpack.c.h.b16 %v425
    %v1102 = vunpack.c.l.b16 %v426
    %v1103 = vunpack.c.h.b16 %v426
    %v1104 = vunpack.c.l.b16 %v427
    %v1105 = vunpack.c.h.b16 %v427
    %v1106 = vunpack.c.l.b16 %v428
    %v1107 = vunpack.c.h.b16 %v428
    %v1108 = vunpack.c.l.b16 %v429
    %v1109 = vunpack.c.h.b16 %v429
    %v1110 = vunpack.c.l.b16 %v430
    %v1111 = vunpack.c.h.b16 %v430
    %v1112 = vunpack.c.l.b16 %v431
    %v1113 = vunpack.c.h.b16 %v431
    %v1114 = vunpack.c.l.b16 %v432
    %v1115 = vunpack.c.h.b16 %v432
    %v1116 = vunpack.c.l.b16 %v433
    %v1117 = vunpack.c.h.b16 %v433
    %v1118 = vunpack.c.l.b16 %v434
    %v1119 = vunpack.c.h.b16 %v434
    %v1120 = vunpack.c.l.b16 %v435
    %v1121 = vunpack.c.h.b16 %v435
    %v1122 = vunpack.c.l.b16 %v436
    %v1123 = vunpack.c.h.b16 %v436
    %v1124 = vunpack.c.l.b16 %v437
    %v1125 = vunpack.c.h.b16 %v437
    %v1126 = vunpack.c.l.b16 %v438
    %v1127 = vunpack.c.h.b16 %v438
    %v1128 = vunpack.c.l.b16 %v439
    %v1129 = vunpack.c.h.b16 %v439
    %v1130 = vunpack.c.l.b16 %v440
    %v1131 = vunpack.c.h.b16 %v440
    %v1132 = vunpack.c.l.b16 %v441
    %v1133 = vunpack.c.h.b16 %v441
    %v1134 = vunpack.c.l.b16 %v442
    %v1135 = vunpack.c.h.b16 %v442
    %v1136 = vunpack.c.l.b16 %v443
    %v1137 = vunpack.c.h.b16 %v443
    %v1138 = vunpack.c.l.b16 %v444
    %v1139 = vunpack.c.h.b16 %v444
    %v1140 = vunpack.c.l.b16 %v445
    %v1141 = vunpack.c.h.b16 %v445
    %v1142 = vunpack.c.l.b16 %v446
    %v1143 = vunpack.c.h.b16 %v446
    %v1144 = vunpack.c.l.b16 %v447
    %v1145 = vunpack.c.h.b16 %v447
    %v1146 = vunpack.c.l.b16 %v448
    %v1147 = vunpack.c.h.b16 %v448
    %v1148 = vunpack.c.l.b16 %v449
    %v1149 = vunpack.c.h.b16 %v449
    %v1150 = vunpack.c.l.b16 %v450
    %v1151 = vunpack.c.h.b16 %v450
    %v1152 = vunpack.c.l.b16 %v451
    %v1153 = vunpack.c.h.b16 %v451
    %v1154 = vunpack.c.l.b16 %v452
    %v1155 = vunpack.c.h.b16 %v452
    %v1156 = vunpack.c.l.b16 %v453
    %v1157 = vunpack.c.h.b16 %v453
    %v1158 = vunpack.c.l.b16 %v454
    %v1159 = vunpack.c.h.b16 %v454
    %v1160 = vunpack.c.l.b16 %v455
    %v1161 = vunpack.c.h.b16 %v455
    %v1162 = vunpack.c.l.b16 %v456
    %v1163 = vunpack.c.h.b16 %v456
    %v1164 = vunpack.c.l.b16 %v457
    %v1165 = vunpack.c.h.b16 %v457
    %v1166 = vunpack.c.l.b16 %v458
    %v1167 = vunpack.c.h.b16 %v458
    %v1168 = vunpack.c.l.b16 %v459
    %v1169 = vunpack.c.h.b16 %v459
    %v1170 = vunpack.c.l.b16 %v460
    %v1171 = vunpack.c.h.b16 %v460
    %v1172 = vunpack.c.l.b16 %v461
    %v1173 = vunpack.c.h.b16 %v461
    %v1174 = vunpack.c.l.b16 %v462
    %v1175 = vunpack.c.h.b16 %v462
    %v1176 = vunpack.c.l.b16 %v463
    %v1177 = vunpack.c.h.b16 %v463
    %v1178 = vunpack.c.l.b16 %v464
    %v1179 = vunpack.c.h.b16 %v464
    %v1180 = vunpack.c.l.b16 %v465
    %v1181 = vunpack.c.h.b16 %v465
    %v1182 = vunpack.c.l.b16 %v466
    %v1183 = vunpack.c.h.b16 %v466
    %v1184 = vunpack.c.l.b16 %v467
    %v1185 = vunpack.c.h.b16 %v467
    %v1186 = vunpack.c.l.b16 %v468
    %v1187 = vunpack.c.h.b16 %v468
    %v1188 = vunpack.c.l.b16 %v469
    %v1189 = vunpack.c.h.b16 %v469
    %v1190 = vunpack.c.l.b16 %v470
    %v1191 = vunpack.c.h.b16 %v470
    %v1192 = vunpack.c.l.b16 %v471
    %v1193 = vunpack.c.h.b16 %v471
    %v1194 = vunpack.c.l.b16 %v472
    %v1195 = vunpack.c.h.b16 %v472
    %v1196 = vunpack.c.l.b16 %v473
    %v1197 = vunpack.c.h.b16 %v473
    %v1198 = vunpack.c.l.b16 %v474
    %v1199 = vunpack.c.h.b16 %v474
    %v1200 = vunpack.c.l.b16 %v475
    %v1201 = vunpack.c.h.b16 %v475
    %v1202 = vunpack.c.l.b16 %v476
    %v1203 = vunpack.c.h.b16 %v476
    %v1204 = vunpack.c.l.b16 %v477
    %v1205 = vunpack.c.h.b16 %v477
    %v1206 = vunpack.c.l.b16 %v478
    %v1207 = vunpack.c.h.b16 %v478
    %v1208 = vunpack.c.l.b16 %v479
    %v1209 = vunpack.c.h.b16 %v479
    %v1210 = vunpack.c.l.b16 %v480
    %v1211 = vunpack.c.h.b16 %v480
    %v1212 = vunpack.c.l.b16 %v481
    %v1213 = vunpack.c.h.b16 %v481
    %v1214 = vunpack.c.l.b16 %v482
    %v1215 = vunpack.c.h.b16 %v482
    %v1216 = vunpack.c.l.b16 %v483
    %v1217 = vunpack.c.h.b16 %v483
    %v1218 = vunpack.c.l.b16 %v484
    %v1219 = vunpack.c.h.b16 %v484
    %v1220 = vunpack.c.l.b16 %v485
    %v1221 = vunpack.c.h.b16 %v485
    %v1222 = vunpack.c.l.b16 %v486
    %v1223 = vunpack.c.h.b16 %v486
    %v1224 = vunpack.c.l.b16 %v487
    %v1225 = vunpack.c.h.b16 %v487
    %v1226 = vpack.c.b16 %v754, %v746
    %v1227 = vpack.c.b16 %v755, %v747
    %v1228 = vpack.c.b16 %v756, %v748
    %v1229 = vpack.c.b16 %v757, %v749
    %v1230 = vpack.c.b16 %v758, %v750
    %v1231 = vpack.c.b16 %v759, %v751
    %v1232 = vpack.c.b16 %v760, %v752
    %v1233 = vpack.c.b16 %v761, %v753
    %v1234 = vpack.c.b16 %v770, %v762
    %v1235 = vpack.c.b16 %v771, %v763
    %v1236 = vpack.c.b16 %v772, %v764
    %v1237 = vpack.c.b16 %v773, %v765
    %v1238 = vpack.c.b16 %v774, %v766
    %v1239 = vpack.c.b16 %v775, %v767
    %v1240 = vpack.c.b16 %v776, %v768
    %v1241 = vpack.c.b16 %v777, %v769
    %v1242 = vpack.c.b16 %v786, %v778
    %v1243 = vpack.c.b16 %v787, %v779
    %v1244 = vpack.c.b16 %v788, %v780
    %v1245 = vpack.c.b16 %v789, %v781
    %v1246 = vpack.c.b16 %v790, %v782
    %v1247 = vpack.c.b16 %v791, %v783
    %v1248 = vpack.c.b16 %v792, %v784
    %v1249 = vpack.c.b16 %v793, %v785
    %v1250 = vpack.c.b16 %v802, %v794
    %v1251 = vpack.c.b16 %v803, %v795
    %v1252 = vpack.c.b16 %v804, %v796
    %v1253 = vpack.c.b16 %v805, %v797
    %v1254 = vpack.c.b16 %v806, %v798
    %v1255 = vpack.c.b16 %v807, %v799
    %v1256 = vpack.c.b16 %v808, %v800
    %v1257 = vpack.c.b16 %v809, %v801
    %v1258 = vpack.c.b16 %v818, %v810
    %v1259 = vpack.c.b16 %v819, %v811
    %v1260 = vpack.c.b16 %v820, %v812
    %v1261 = vpack.c.b16 %v821, %v813
    %v1262 = vpack.c.b16 %v822, %v814
    %v1263 = vpack.c.b16 %v823, %v815
    %v1264 = vpack.c.b16 %v824, %v816
    %v1265 = vpack.c.b16 %v825, %v817
    %v1266 = vpack.c.b16 %v834, %v826
    %v1267 = vpack.c.b16 %v835, %v827
    %v1268 = vpack.c.b16 %v836, %v828
    %v1269 = vpack.c.b16 %v837, %v829
    %v1270 = vpack.c.b16 %v838, %v830
    %v1271 = vpack.c.b16 %v839, %v831
    %v1272 = vpack.c.b16 %v840, %v832
    %v1273 = vpack.c.b16 %v841, %v833
    %v1274 = vpack.c.b16 %v850, %v842
    %v1275 = vpack.c.b16 %v851, %v843
    %v1276 = vpack.c.b16 %v852, %v844
    %v1277 = vpack.c.b16 %v853, %v845
    %v1278 = vpack.c.b16 %v854, %v846
    %v1279 = vpack.c.b16 %v855, %v847
    %v1280 = vpack.c.b16 %v856, %v848
    %v1281 = vpack.c.b16 %v857, %v849
    %v1282 = vpack.c.b16 %v866, %v858
    %v1283 = vpack.c.b16 %v867, %v859
    %v1284 = vpack.c.b16 %v868, %v860
    %v1285 = vpack.c.b16 %v869, %v861
    %v1286 = vpack.c.b16 %v870, %v862
    %v1287 = vpack.c.b16 %v871, %v863
    %v1288 = vpack.c.b16 %v872, %v864
    %v1289 = vpack.c.b16 %v873, %v865
    %v1290 = vpack.c.b16 %v882, %v874
    %v1291 = vpack.c.b16 %v883, %v875
    %v1292 = vpack.c.b16 %v884, %v876
    %v1293 = vpack.c.b16 %v885, %v877
    %v1294 = vpack.c.b16 %v886, %v878
    %v1295 = vpack.c.b16 %v887, %v879
    %v1296 = vpack.c.b16 %v888, %v880
    %v1297 = vpack.c.b16 %v889, %v881
    %v1298 = vpack.c.b16 %v898, %v890
    %v1299 = vpack.c.b16 %v899, %v891
    %v1300 = vpack.c.b16 %v900, %v892
    %v1301 = vpack.c.b16 %v901, %v893
    %v1302 = vpack.c.b16 %v902, %v894
    %v1303 = vpack.c.b16 %v903, %v895
    %v1304 = vpack.c.b16 %v904, %v896
    %v1305 = vpack.c.b16 %v905, %v897
    %v1306 = vpack.c.b16 %v914, %v906
    %v1307 = vpack.c.b16 %v915, %v907
    %v1308 = vpack.c.b16 %v916, %v908
    %v1309 = vpack.c.b16 %v917, %v909
    %v1310 = vpack.c.b16 %v918, %v910
    %v1311 = vpack.c.b16 %v919, %v911
    %v1312 = vpack.c.b16 %v920, %v912
    %v1313 = vpack.c.b16 %v921, %v913
    %v1314 = vpack.c.b16 %v930, %v922
    %v1315 = vpack.c.b16 %v931, %v923
    %v1316 = vpack.c.b16 %v932, %v924
    %v1317 = vpack.c.b16 %v933, %v925
    %v1318 = vpack.c.b16 %v934, %v926
    %v1319 = vpack.c.b16 %v935, %v927
    %v1320 = vpack.c.b16 %v936, %v928
    %v1321 = vpack.c.b16 %v937, %v929
    %v1322 = vpack.c.b16 %v946, %v938
    %v1323 = vpack.c.b16 %v947, %v939
    %v1324 = vpack.c.b16 %v948, %v940
    %v1325 = vpack.c.b16 %v949, %v941
    %v1326 = vpack.c.b16 %v950, %v942
    %v1327 = vpack.c.b16 %v951, %v943
    %v1328 = vpack.c.b16 %v952, %v944
    %v1329 = vpack.c.b16 %v953, %v945
    %v1330 = vpack.c.b16 %v962, %v954
    %v1331 = vpack.c.b16 %v963, %v955
    %v1332 = vpack.c.b16 %v964, %v956
    %v1333 = vpack.c.b16 %v965, %v957
    %v1334 = vpack.c.b16 %v966, %v958
    %v1335 = vpack.c.b16 %v967, %v959
    %v1336 = vpack.c.b16 %v968, %v960
    %v1337 = vpack.c.b16 %v969, %v961
    %v1338 = vpack.c.b16 %v978, %v970
    %v1339 = vpack.c.b16 %v979, %v971
    %v1340 = vpack.c.b16 %v980, %v972
    %v1341 = vpack.c.b16 %v981, %v973
    %v1342 = vpack.c.b16 %v982, %v974
    %v1343 = vpack.c.b16 %v983, %v975
    %v1344 = vpack.c.b16 %v984, %v976
    %v1345 = vpack.c.b16 %v985, %v977
    %v1346 = vpack.c.b16 %v994, %v986
    %v1347 = vpack.c.b16 %v995, %v987
    %v1348 = vpack.c.b16 %v996, %v988
    %v1349 = vpack.c.b16 %v997, %v989
    %v1350 = vpack.c.b16 %v998, %v990
    %v1351 = vpack.c.b16 %v999, %v991
    %v1352 = vpack.c.b16 %v1000, %v992
    %v1353 = vpack.c.b16 %v1001, %v993
    %v1354 = vpack.c.b16 %v1010, %v1002
    %v1355 = vpack.c.b16 %v1011, %v1003
    %v1356 = vpack.c.b16 %v1012, %v1004
    %v1357 = vpack.c.b16 %v1013, %v1005
    %v1358 = vpack.c.b16 %v1014, %v1006
    %v1359 = vpack.c.b16 %v1015, %v1007
    %v1360 = vpack.c.b16 %v1016, %v1008
    %v1361 = vpack.c.b16 %v1017, %v1009
    %v1362 = vpack.c.b16 %v1026, %v1018
    %v1363 = vpack.c.b16 %v1027, %v1019
    %v1364 = vpack.c.b16 %v1028, %v1020
    %v1365 = vpack.c.b16 %v1029, %v1021
    %v1366 = vpack.c.b16 %v1030, %v1022
    %v1367 = vpack.c.b16 %v1031, %v1023
    %v1368 = vpack.c.b16 %v1032, %v1024
    %v1369 = vpack.c.b16 %v1033, %v1025
    %v1370 = vpack.c.b16 %v1042, %v1034
    %v1371 = vpack.c.b16 %v1043, %v1035
    %v1372 = vpack.c.b16 %v1044, %v1036
    %v1373 = vpack.c.b16 %v1045, %v1037
    %v1374 = vpack.c.b16 %v1046, %v1038
    %v1375 = vpack.c.b16 %v1047, %v1039
    %v1376 = vpack.c.b16 %v1048, %v1040
    %v1377 = vpack.c.b16 %v1049, %v1041
    %v1378 = vpack.c.b16 %v1058, %v1050
    %v1379 = vpack.c.b16 %v1059, %v1051
    %v1380 = vpack.c.b16 %v1060, %v1052
    %v1381 = vpack.c.b16 %v1061, %v1053
    %v1382 = vpack.c.b16 %v1062, %v1054
    %v1383 = vpack.c.b16 %v1063, %v1055
    %v1384 = vpack.c.b16 %v1064, %v1056
    %v1385 = vpack.c.b16 %v1065, %v1057
    %v1386 = vpack.c.b16 %v1074, %v1066
    %v1387 = vpack.c.b16 %v1075, %v1067
    %v1388 = vpack.c.b16 %v1076, %v1068
    %v1389 = vpack.c.b16 %v1077, %v1069
    %v1390 = vpack.c.b16 %v1078, %v1070
    %v1391 = vpack.c.b16 %v1079, %v1071
    %v1392 = vpack.c.b16 %v1080, %v1072
    %v1393 = vpack.c.b16 %v1081, %v1073
    %v1394 = vpack.c.b16 %v1090, %v1082
    %v1395 = vpack.c.b16 %v1091, %v1083
    %v1396 = vpack.c.b16 %v1092, %v1084
    %v1397 = vpack.c.b16 %v1093, %v1085
    %v1398 = vpack.c.b16 %v1094, %v1086
    %v1399 = vpack.c.b16 %v1095, %v1087
    %v1400 = vpack.c.b16 %v1096, %v1088
    %v1401 = vpack.c.b16 %v1097, %v1089
    %v1402 = vpack.c.b16 %v1106, %v1098
    %v1403 = vpack.c.b16 %v1107, %v1099
    %v1404 = vpack.c.b16 %v1108, %v1100
    %v1405 = vpack.c.b16 %v1109, %v1101
    %v1406 = vpack.c.b16 %v1110, %v1102
    %v1407 = vpack.c.b16 %v1111, %v1103
    %v1408 = vpack.c.b16 %v1112, %v1104
    %v1409 = vpack.c.b16 %v1113, %v1105
    %v1410 = vpack.c.b16 %v1122, %v1114
    %v1411 = vpack.c.b16 %v1123, %v1115
    %v1412 = vpack.c.b16 %v1124, %v1116
    %v1413 = vpack.c.b16 %v1125, %v1117
    %v1414 = vpack.c.b16 %v1126, %v1118
    %v1415 = vpack.c.b16 %v1127, %v1119
    %v1416 = vpack.c.b16 %v1128, %v1120
    %v1417 = vpack.c.b16 %v1129, %v1121
    %v1418 = vpack.c.b16 %v1138, %v1130
    %v1419 = vpack.c.b16 %v1139, %v1131
    %v1420 = vpack.c.b16 %v1140, %v1132
    %v1421 = vpack.c.b16 %v1141, %v1133
    %v1422 = vpack.c.b16 %v1142, %v1134
    %v1423 = vpack.c.b16 %v1143, %v1135
    %v1424 = vpack.c.b16 %v1144, %v1136
    %v1425 = vpack.c.b16 %v1145, %v1137
    %v1426 = vpack.c.b16 %v1154, %v1146
    %v1427 = vpack.c.b16 %v1155, %v1147
    %v1428 = vpack.c.b16 %v1156, %v1148
    %v1429 = vpack.c.b16 %v1157, %v1149
    %v1430 = vpack.c.b16 %v1158, %v1150
    %v1431 = vpack.c.b16 %v1159, %v1151
    %v1432 = vpack.c.b16 %v1160, %v1152
    %v1433 = vpack.c.b16 %v1161, %v1153
    %v1434 = vpack.c.b16 %v1170, %v1162
    %v1435 = vpack.c.b16 %v1171, %v1163
    %v1436 = vpack.c.b16 %v1172, %v1164
    %v1437 = vpack.c.b16 %v1173, %v1165
    %v1438 = vpack.c.b16 %v1174, %v1166
    %v1439 = vpack.c.b16 %v1175, %v1167
    %v1440 = vpack.c.b16 %v1176, %v1168
    %v1441 = vpack.c.b16 %v1177, %v1169
    %v1442 = vpack.c.b16 %v1186, %v1178
    %v1443 = vpack.c.b16 %v1187, %v1179
    %v1444 = vpack.c.b16 %v1188, %v1180
    %v1445 = vpack.c.b16 %v1189, %v1181
    %v1446 = vpack.c.b16 %v1190, %v1182
    %v1447 = vpack.c.b16 %v1191, %v1183
    %v1448 = vpack.c.b16 %v1192, %v1184
    %v1449 = vpack.c.b16 %v1193, %v1185
    %v1450 = vpack.c.b16 %v1202, %v1194
    %v1451 = vpack.c.b16 %v1203, %v1195
    %v1452 = vpack.c.b16 %v1204, %v1196
    %v1453 = vpack.c.b16 %v1205, %v1197
    %v1454 = vpack.c.b16 %v1206, %v1198
    %v1455 = vpack.c.b16 %v1207, %v1199
    %v1456 = vpack.c.b16 %v1208, %v1200
    %v1457 = vpack.c.b16 %v1209, %v1201
    %v1458 = vpack.c.b16 %v1218, %v1210
    %v1459 = vpack.c.b16 %v1219, %v1211
    %v1460 = vpack.c.b16 %v1220, %v1212
    %v1461 = vpack.c.b16 %v1221, %v1213
    %v1462 = vpack.c.b16 %v1222, %v1214
    %v1463 = vpack.c.b16 %v1223, %v1215
    %v1464 = vpack.c.b16 %v1224, %v1216
    %v1465 = vpack.c.b16 %v1225, %v1217
    %vm1706 = vcmask 785408
    %v1708 = vsel %vm1706, %v247, 0
    %1710 = vmatpush.bf16.msra.mxu0 %v1282
    %1711 = vmatpush.bf16.msra.mxu0 %v1274
    %1712 = vmatpush.bf16.msra.mxu0 %v1266
    %1713 = vmatpush.bf16.msra.mxu0 %v1258
    %1714 = vmatpush.bf16.msra.mxu0 %v1250
    %1715 = vmatpush.bf16.msra.mxu0 %v1242
    %1716 = vmatpush.bf16.msra.mxu0 %v1234
    %1717 = vmatpush.bf16.msra.mxu0 %v1226
    %1718 = vmatmul.bf16.gmra.mxu0 %v244
    %v1719 = vpop.f32.mrf.mxu0
    %v1720 = vadd.f32 %v490, %v1719
    %v1721 = vpop.f32.mrf.mxu0
    %1722 = vdwg.mxu0
    %1723 = vmatpush.bf16.msra.mxu0 %v1346
    %1724 = vmatpush.bf16.msra.mxu0 %v1338
    %1725 = vmatpush.bf16.msra.mxu0 %v1330
    %1726 = vmatpush.bf16.msra.mxu0 %v1322
    %1727 = vmatpush.bf16.msra.mxu0 %v1314
    %1728 = vmatpush.bf16.msra.mxu0 %v1306
    %1729 = vmatpush.bf16.msra.mxu0 %v1298
    %1730 = vmatpush.bf16.msra.mxu0 %v1290
    %1731 = vmatmul.bf16.gmra.mxu0 %v245
    %v1732 = vpop.f32.mrf.mxu0
    %v1733 = vadd.f32 %v1720, %v1732
    %v1734 = vpop.f32.mrf.mxu0
    %1735 = vdwg.mxu0
    %1736 = vmatpush.bf16.msra.mxu0 %v1410
    %1737 = vmatpush.bf16.msra.mxu0 %v1402
    %1738 = vmatpush.bf16.msra.mxu0 %v1394
    %1739 = vmatpush.bf16.msra.mxu0 %v1386
    %1740 = vmatpush.bf16.msra.mxu0 %v1378
    %1741 = vmatpush.bf16.msra.mxu0 %v1370
    %1742 = vmatpush.bf16.msra.mxu0 %v1362
    %1743 = vmatpush.bf16.msra.mxu0 %v1354
    %1744 = vmatmul.bf16.gmra.mxu0 %v246
    %v1745 = vpop.f32.mrf.mxu0
    %v1746 = vadd.f32 %v1733, %v1745
    %v1747 = vpop.f32.mrf.mxu0
    %1748 = vdwg.mxu0
    %1749 = vmatpush.bf16.msra.mxu0 0
    %1750 = vmatpush.bf16.msra.mxu0 0
    %1751 = vmatpush.bf16.msra.mxu0 %v1458
    %1752 = vmatpush.bf16.msra.mxu0 %v1450
    %1753 = vmatpush.bf16.msra.mxu0 %v1442
    %1754 = vmatpush.bf16.msra.mxu0 %v1434
    %1755 = vmatpush.bf16.msra.mxu0 %v1426
    %1756 = vmatpush.bf16.msra.mxu0 %v1418
    %1757 = vmatmul.bf16.gmra.mxu0 %v1708
    %v1758 = vpop.f32.mrf.mxu0
    %v1759 = vadd.f32 %v1746, %v1758
    %v1760 = vpop.f32.mrf.mxu0
    %1761 = vdwg.mxu0
    %1762 = vmatpush.bf16.msra.mxu0 %v1283
    %1763 = vmatpush.bf16.msra.mxu0 %v1275
    %1764 = vmatpush.bf16.msra.mxu0 %v1267
    %1765 = vmatpush.bf16.msra.mxu0 %v1259
    %1766 = vmatpush.bf16.msra.mxu0 %v1251
    %1767 = vmatpush.bf16.msra.mxu0 %v1243
    %1768 = vmatpush.bf16.msra.mxu0 %v1235
    %1769 = vmatpush.bf16.msra.mxu0 %v1227
    %1770 = vmatmul.bf16.gmra.mxu0 %v244
    %v1771 = vpop.f32.mrf.mxu0
    %v1772 = vadd.f32 %v491, %v1771
    %v1773 = vpop.f32.mrf.mxu0
    %1774 = vdwg.mxu0
    %1775 = vmatpush.bf16.msra.mxu0 %v1347
    %1776 = vmatpush.bf16.msra.mxu0 %v1339
    %1777 = vmatpush.bf16.msra.mxu0 %v1331
    %1778 = vmatpush.bf16.msra.mxu0 %v1323
    %1779 = vmatpush.bf16.msra.mxu0 %v1315
    %1780 = vmatpush.bf16.msra.mxu0 %v1307
    %1781 = vmatpush.bf16.msra.mxu0 %v1299
    %1782 = vmatpush.bf16.msra.mxu0 %v1291
    %1783 = vmatmul.bf16.gmra.mxu0 %v245
    %v1784 = vpop.f32.mrf.mxu0
    %v1785 = vadd.f32 %v1772, %v1784
    %v1786 = vpop.f32.mrf.mxu0
    %1787 = vdwg.mxu0
    %1788 = vmatpush.bf16.msra.mxu0 %v1411
    %1789 = vmatpush.bf16.msra.mxu0 %v1403
    %1790 = vmatpush.bf16.msra.mxu0 %v1395
    %1791 = vmatpush.bf16.msra.mxu0 %v1387
    %1792 = vmatpush.bf16.msra.mxu0 %v1379
    %1793 = vmatpush.bf16.msra.mxu0 %v1371
    %1794 = vmatpush.bf16.msra.mxu0 %v1363
    %1795 = vmatpush.bf16.msra.mxu0 %v1355
    %1796 = vmatmul.bf16.gmra.mxu0 %v246
    %v1797 = vpop.f32.mrf.mxu0
    %v1798 = vadd.f32 %v1785, %v1797
    %v1799 = vpop.f32.mrf.mxu0
    %1800 = vdwg.mxu0
    %1801 = vmatpush.bf16.msra.mxu0 0
    %1802 = vmatpush.bf16.msra.mxu0 0
    %1803 = vmatpush.bf16.msra.mxu0 %v1459
    %1804 = vmatpush.bf16.msra.mxu0 %v1451
    %1805 = vmatpush.bf16.msra.mxu0 %v1443
    %1806 = vmatpush.bf16.msra.mxu0 %v1435
    %1807 = vmatpush.bf16.msra.mxu0 %v1427
    %1808 = vmatpush.bf16.msra.mxu0 %v1419
    %1809 = vmatmul.bf16.gmra.mxu0 %v1708
    %v1810 = vpop.f32.mrf.mxu0
    %v1811 = vadd.f32 %v1798, %v1810
    %v1812 = vpop.f32.mrf.mxu0
    %1813 = vdwg.mxu0
    %1814 = vmatpush.bf16.msra.mxu0 %v1284
    %1815 = vmatpush.bf16.msra.mxu0 %v1276
    %1816 = vmatpush.bf16.msra.mxu0 %v1268
    %1817 = vmatpush.bf16.msra.mxu0 %v1260
    %1818 = vmatpush.bf16.msra.mxu0 %v1252
    %1819 = vmatpush.bf16.msra.mxu0 %v1244
    %1820 = vmatpush.bf16.msra.mxu0 %v1236
    %1821 = vmatpush.bf16.msra.mxu0 %v1228
    %1822 = vmatmul.bf16.gmra.mxu0 %v244
    %v1823 = vpop.f32.mrf.mxu0
    %v1824 = vadd.f32 %v492, %v1823
    %v1825 = vpop.f32.mrf.mxu0
    %1826 = vdwg.mxu0
    %1827 = vmatpush.bf16.msra.mxu0 %v1348
    %1828 = vmatpush.bf16.msra.mxu0 %v1340
    %1829 = vmatpush.bf16.msra.mxu0 %v1332
    %1830 = vmatpush.bf16.msra.mxu0 %v1324
    %1831 = vmatpush.bf16.msra.mxu0 %v1316
    %1832 = vmatpush.bf16.msra.mxu0 %v1308
    %1833 = vmatpush.bf16.msra.mxu0 %v1300
    %1834 = vmatpush.bf16.msra.mxu0 %v1292
    %1835 = vmatmul.bf16.gmra.mxu0 %v245
    %v1836 = vpop.f32.mrf.mxu0
    %v1837 = vadd.f32 %v1824, %v1836
    %v1838 = vpop.f32.mrf.mxu0
    %1839 = vdwg.mxu0
    %1840 = vmatpush.bf16.msra.mxu0 %v1412
    %1841 = vmatpush.bf16.msra.mxu0 %v1404
    %1842 = vmatpush.bf16.msra.mxu0 %v1396
    %1843 = vmatpush.bf16.msra.mxu0 %v1388
    %1844 = vmatpush.bf16.msra.mxu0 %v1380
    %1845 = vmatpush.bf16.msra.mxu0 %v1372
    %1846 = vmatpush.bf16.msra.mxu0 %v1364
    %1847 = vmatpush.bf16.msra.mxu0 %v1356
    %1848 = vmatmul.bf16.gmra.mxu0 %v246
    %v1849 = vpop.f32.mrf.mxu0
    %v1850 = vadd.f32 %v1837, %v1849
    %v1851 = vpop.f32.mrf.mxu0
    %1852 = vdwg.mxu0
    %1853 = vmatpush.bf16.msra.mxu0 0
    %1854 = vmatpush.bf16.msra.mxu0 0
    %1855 = vmatpush.bf16.msra.mxu0 %v1460
    %1856 = vmatpush.bf16.msra.mxu0 %v1452
    %1857 = vmatpush.bf16.msra.mxu0 %v1444
    %1858 = vmatpush.bf16.msra.mxu0 %v1436
    %1859 = vmatpush.bf16.msra.mxu0 %v1428
    %1860 = vmatpush.bf16.msra.mxu0 %v1420
    %1861 = vmatmul.bf16.gmra.mxu0 %v1708
    %v1862 = vpop.f32.mrf.mxu0
    %v1863 = vadd.f32 %v1850, %v1862
    %v1864 = vpop.f32.mrf.mxu0
    %1865 = vdwg.mxu0
    %1866 = vmatpush.bf16.msra.mxu0 %v1285
    %1867 = vmatpush.bf16.msra.mxu0 %v1277
    %1868 = vmatpush.bf16.msra.mxu0 %v1269
    %1869 = vmatpush.bf16.msra.mxu0 %v1261
    %1870 = vmatpush.bf16.msra.mxu0 %v1253
    %1871 = vmatpush.bf16.msra.mxu0 %v1245
    %1872 = vmatpush.bf16.msra.mxu0 %v1237
    %1873 = vmatpush.bf16.msra.mxu0 %v1229
    %1874 = vmatmul.bf16.gmra.mxu0 %v244
    %v1875 = vpop.f32.mrf.mxu0
    %v1876 = vadd.f32 %v493, %v1875
    %v1877 = vpop.f32.mrf.mxu0
    %1878 = vdwg.mxu0
    %1879 = vmatpush.bf16.msra.mxu0 %v1349
    %1880 = vmatpush.bf16.msra.mxu0 %v1341
    %1881 = vmatpush.bf16.msra.mxu0 %v1333
    %1882 = vmatpush.bf16.msra.mxu0 %v1325
    %1883 = vmatpush.bf16.msra.mxu0 %v1317
    %1884 = vmatpush.bf16.msra.mxu0 %v1309
    %1885 = vmatpush.bf16.msra.mxu0 %v1301
    %1886 = vmatpush.bf16.msra.mxu0 %v1293
    %1887 = vmatmul.bf16.gmra.mxu0 %v245
    %v1888 = vpop.f32.mrf.mxu0
    %v1889 = vadd.f32 %v1876, %v1888
    %v1890 = vpop.f32.mrf.mxu0
    %1891 = vdwg.mxu0
    %1892 = vmatpush.bf16.msra.mxu0 %v1413
    %1893 = vmatpush.bf16.msra.mxu0 %v1405
    %1894 = vmatpush.bf16.msra.mxu0 %v1397
    %1895 = vmatpush.bf16.msra.mxu0 %v1389
    %1896 = vmatpush.bf16.msra.mxu0 %v1381
    %1897 = vmatpush.bf16.msra.mxu0 %v1373
    %1898 = vmatpush.bf16.msra.mxu0 %v1365
    %1899 = vmatpush.bf16.msra.mxu0 %v1357
    %1900 = vmatmul.bf16.gmra.mxu0 %v246
    %v1901 = vpop.f32.mrf.mxu0
    %v1902 = vadd.f32 %v1889, %v1901
    %v1903 = vpop.f32.mrf.mxu0
    %1904 = vdwg.mxu0
    %1905 = vmatpush.bf16.msra.mxu0 0
    %1906 = vmatpush.bf16.msra.mxu0 0
    %1907 = vmatpush.bf16.msra.mxu0 %v1461
    %1908 = vmatpush.bf16.msra.mxu0 %v1453
    %1909 = vmatpush.bf16.msra.mxu0 %v1445
    %1910 = vmatpush.bf16.msra.mxu0 %v1437
    %1911 = vmatpush.bf16.msra.mxu0 %v1429
    %1912 = vmatpush.bf16.msra.mxu0 %v1421
    %1913 = vmatmul.bf16.gmra.mxu0 %v1708
    %v1914 = vpop.f32.mrf.mxu0
    %v1915 = vadd.f32 %v1902, %v1914
    %v1916 = vpop.f32.mrf.mxu0
    %1917 = vdwg.mxu0
    %1918 = vmatpush.bf16.msra.mxu0 %v1286
    %1919 = vmatpush.bf16.msra.mxu0 %v1278
    %1920 = vmatpush.bf16.msra.mxu0 %v1270
    %1921 = vmatpush.bf16.msra.mxu0 %v1262
    %1922 = vmatpush.bf16.msra.mxu0 %v1254
    %1923 = vmatpush.bf16.msra.mxu0 %v1246
    %1924 = vmatpush.bf16.msra.mxu0 %v1238
    %1925 = vmatpush.bf16.msra.mxu0 %v1230
    %1926 = vmatmul.bf16.gmra.mxu0 %v244
    %v1927 = vpop.f32.mrf.mxu0
    %v1928 = vadd.f32 %v494, %v1927
    %v1929 = vpop.f32.mrf.mxu0
    %1930 = vdwg.mxu0
    %1931 = vmatpush.bf16.msra.mxu0 %v1350
    %1932 = vmatpush.bf16.msra.mxu0 %v1342
    %1933 = vmatpush.bf16.msra.mxu0 %v1334
    %1934 = vmatpush.bf16.msra.mxu0 %v1326
    %1935 = vmatpush.bf16.msra.mxu0 %v1318
    %1936 = vmatpush.bf16.msra.mxu0 %v1310
    %1937 = vmatpush.bf16.msra.mxu0 %v1302
    %1938 = vmatpush.bf16.msra.mxu0 %v1294
    %1939 = vmatmul.bf16.gmra.mxu0 %v245
    %v1940 = vpop.f32.mrf.mxu0
    %v1941 = vadd.f32 %v1928, %v1940
    %v1942 = vpop.f32.mrf.mxu0
    %1943 = vdwg.mxu0
    %1944 = vmatpush.bf16.msra.mxu0 %v1414
    %1945 = vmatpush.bf16.msra.mxu0 %v1406
    %1946 = vmatpush.bf16.msra.mxu0 %v1398
    %1947 = vmatpush.bf16.msra.mxu0 %v1390
    %1948 = vmatpush.bf16.msra.mxu0 %v1382
    %1949 = vmatpush.bf16.msra.mxu0 %v1374
    %1950 = vmatpush.bf16.msra.mxu0 %v1366
    %1951 = vmatpush.bf16.msra.mxu0 %v1358
    %1952 = vmatmul.bf16.gmra.mxu0 %v246
    %v1953 = vpop.f32.mrf.mxu0
    %v1954 = vadd.f32 %v1941, %v1953
    %v1955 = vpop.f32.mrf.mxu0
    %1956 = vdwg.mxu0
    %1957 = vmatpush.bf16.msra.mxu0 0
    %1958 = vmatpush.bf16.msra.mxu0 0
    %1959 = vmatpush.bf16.msra.mxu0 %v1462
    %1960 = vmatpush.bf16.msra.mxu0 %v1454
    %1961 = vmatpush.bf16.msra.mxu0 %v1446
    %1962 = vmatpush.bf16.msra.mxu0 %v1438
    %1963 = vmatpush.bf16.msra.mxu0 %v1430
    %1964 = vmatpush.bf16.msra.mxu0 %v1422
    %1965 = vmatmul.bf16.gmra.mxu0 %v1708
    %v1966 = vpop.f32.mrf.mxu0
    %v1967 = vadd.f32 %v1954, %v1966
    %v1968 = vpop.f32.mrf.mxu0
    %1969 = vdwg.mxu0
    %1970 = vmatpush.bf16.msra.mxu0 %v1287
    %1971 = vmatpush.bf16.msra.mxu0 %v1279
    %1972 = vmatpush.bf16.msra.mxu0 %v1271
    %1973 = vmatpush.bf16.msra.mxu0 %v1263
    %1974 = vmatpush.bf16.msra.mxu0 %v1255
    %1975 = vmatpush.bf16.msra.mxu0 %v1247
    %1976 = vmatpush.bf16.msra.mxu0 %v1239
    %1977 = vmatpush.bf16.msra.mxu0 %v1231
    %1978 = vmatmul.bf16.gmra.mxu0 %v244
    %v1979 = vpop.f32.mrf.mxu0
    %v1980 = vadd.f32 %v495, %v1979
    %v1981 = vpop.f32.mrf.mxu0
    %1982 = vdwg.mxu0
    %1983 = vmatpush.bf16.msra.mxu0 %v1351
    %1984 = vmatpush.bf16.msra.mxu0 %v1343
    %1985 = vmatpush.bf16.msra.mxu0 %v1335
    %1986 = vmatpush.bf16.msra.mxu0 %v1327
    %1987 = vmatpush.bf16.msra.mxu0 %v1319
    %1988 = vmatpush.bf16.msra.mxu0 %v1311
    %1989 = vmatpush.bf16.msra.mxu0 %v1303
    %1990 = vmatpush.bf16.msra.mxu0 %v1295
    %1991 = vmatmul.bf16.gmra.mxu0 %v245
    %v1992 = vpop.f32.mrf.mxu0
    %v1993 = vadd.f32 %v1980, %v1992
    %v1994 = vpop.f32.mrf.mxu0
    %1995 = vdwg.mxu0
    %1996 = vmatpush.bf16.msra.mxu0 %v1415
    %1997 = vmatpush.bf16.msra.mxu0 %v1407
    %1998 = vmatpush.bf16.msra.mxu0 %v1399
    %1999 = vmatpush.bf16.msra.mxu0 %v1391
    %2000 = vmatpush.bf16.msra.mxu0 %v1383
    %2001 = vmatpush.bf16.msra.mxu0 %v1375
    %2002 = vmatpush.bf16.msra.mxu0 %v1367
    %2003 = vmatpush.bf16.msra.mxu0 %v1359
    %2004 = vmatmul.bf16.gmra.mxu0 %v246
    %v2005 = vpop.f32.mrf.mxu0
    %v2006 = vadd.f32 %v1993, %v2005
    %v2007 = vpop.f32.mrf.mxu0
    %2008 = vdwg.mxu0
    %2009 = vmatpush.bf16.msra.mxu0 0
    %2010 = vmatpush.bf16.msra.mxu0 0
    %2011 = vmatpush.bf16.msra.mxu0 %v1463
    %2012 = vmatpush.bf16.msra.mxu0 %v1455
    %2013 = vmatpush.bf16.msra.mxu0 %v1447
    %2014 = vmatpush.bf16.msra.mxu0 %v1439
    %2015 = vmatpush.bf16.msra.mxu0 %v1431
    %2016 = vmatpush.bf16.msra.mxu0 %v1423
    %2017 = vmatmul.bf16.gmra.mxu0 %v1708
    %v2018 = vpop.f32.mrf.mxu0
    %v2019 = vadd.f32 %v2006, %v2018
    %v2020 = vpop.f32.mrf.mxu0
    %2021 = vdwg.mxu0
    %2022 = vmatpush.bf16.msra.mxu0 %v1288
    %2023 = vmatpush.bf16.msra.mxu0 %v1280
    %2024 = vmatpush.bf16.msra.mxu0 %v1272
    %2025 = vmatpush.bf16.msra.mxu0 %v1264
    %2026 = vmatpush.bf16.msra.mxu0 %v1256
    %2027 = vmatpush.bf16.msra.mxu0 %v1248
    %2028 = vmatpush.bf16.msra.mxu0 %v1240
    %2029 = vmatpush.bf16.msra.mxu0 %v1232
    %2030 = vmatmul.bf16.gmra.mxu0 %v244
    %v2031 = vpop.f32.mrf.mxu0
    %v2032 = vadd.f32 %v496, %v2031
    %v2033 = vpop.f32.mrf.mxu0
    %2034 = vdwg.mxu0
    %2035 = vmatpush.bf16.msra.mxu0 %v1352
    %2036 = vmatpush.bf16.msra.mxu0 %v1344
    %2037 = vmatpush.bf16.msra.mxu0 %v1336
    %2038 = vmatpush.bf16.msra.mxu0 %v1328
    %2039 = vmatpush.bf16.msra.mxu0 %v1320
    %2040 = vmatpush.bf16.msra.mxu0 %v1312
    %2041 = vmatpush.bf16.msra.mxu0 %v1304
    %2042 = vmatpush.bf16.msra.mxu0 %v1296
    %2043 = vmatmul.bf16.gmra.mxu0 %v245
    %v2044 = vpop.f32.mrf.mxu0
    %v2045 = vadd.f32 %v2032, %v2044
    %v2046 = vpop.f32.mrf.mxu0
    %2047 = vdwg.mxu0
    %2048 = vmatpush.bf16.msra.mxu0 %v1416
    %2049 = vmatpush.bf16.msra.mxu0 %v1408
    %2050 = vmatpush.bf16.msra.mxu0 %v1400
    %2051 = vmatpush.bf16.msra.mxu0 %v1392
    %2052 = vmatpush.bf16.msra.mxu0 %v1384
    %2053 = vmatpush.bf16.msra.mxu0 %v1376
    %2054 = vmatpush.bf16.msra.mxu0 %v1368
    %2055 = vmatpush.bf16.msra.mxu0 %v1360
    %2056 = vmatmul.bf16.gmra.mxu0 %v246
    %v2057 = vpop.f32.mrf.mxu0
    %v2058 = vadd.f32 %v2045, %v2057
    %v2059 = vpop.f32.mrf.mxu0
    %2060 = vdwg.mxu0
    %2061 = vmatpush.bf16.msra.mxu0 0
    %2062 = vmatpush.bf16.msra.mxu0 0
    %2063 = vmatpush.bf16.msra.mxu0 %v1464
    %2064 = vmatpush.bf16.msra.mxu0 %v1456
    %2065 = vmatpush.bf16.msra.mxu0 %v1448
    %2066 = vmatpush.bf16.msra.mxu0 %v1440
    %2067 = vmatpush.bf16.msra.mxu0 %v1432
    %2068 = vmatpush.bf16.msra.mxu0 %v1424
    %2069 = vmatmul.bf16.gmra.mxu0 %v1708
    %v2070 = vpop.f32.mrf.mxu0
    %v2071 = vadd.f32 %v2058, %v2070
    %v2072 = vpop.f32.mrf.mxu0
    %2073 = vdwg.mxu0
    %2074 = vmatpush.bf16.msra.mxu0 %v1289
    %2075 = vmatpush.bf16.msra.mxu0 %v1281
    %2076 = vmatpush.bf16.msra.mxu0 %v1273
    %2077 = vmatpush.bf16.msra.mxu0 %v1265
    %2078 = vmatpush.bf16.msra.mxu0 %v1257
    %2079 = vmatpush.bf16.msra.mxu0 %v1249
    %2080 = vmatpush.bf16.msra.mxu0 %v1241
    %2081 = vmatpush.bf16.msra.mxu0 %v1233
    %2082 = vmatmul.bf16.gmra.mxu0 %v244
    %v2083 = vpop.f32.mrf.mxu0
    %v2084 = vadd.f32 %v497, %v2083
    %v2085 = vpop.f32.mrf.mxu0
    %2086 = vdwg.mxu0
    %2087 = vmatpush.bf16.msra.mxu0 %v1353
    %2088 = vmatpush.bf16.msra.mxu0 %v1345
    %2089 = vmatpush.bf16.msra.mxu0 %v1337
    %2090 = vmatpush.bf16.msra.mxu0 %v1329
    %2091 = vmatpush.bf16.msra.mxu0 %v1321
    %2092 = vmatpush.bf16.msra.mxu0 %v1313
    %2093 = vmatpush.bf16.msra.mxu0 %v1305
    %2094 = vmatpush.bf16.msra.mxu0 %v1297
    %2095 = vmatmul.bf16.gmra.mxu0 %v245
    %v2096 = vpop.f32.mrf.mxu0
    %v2097 = vadd.f32 %v2084, %v2096
    %v2098 = vpop.f32.mrf.mxu0
    %2099 = vdwg.mxu0
    %2100 = vmatpush.bf16.msra.mxu0 %v1417
    %2101 = vmatpush.bf16.msra.mxu0 %v1409
    %2102 = vmatpush.bf16.msra.mxu0 %v1401
    %2103 = vmatpush.bf16.msra.mxu0 %v1393
    %2104 = vmatpush.bf16.msra.mxu0 %v1385
    %2105 = vmatpush.bf16.msra.mxu0 %v1377
    %2106 = vmatpush.bf16.msra.mxu0 %v1369
    %2107 = vmatpush.bf16.msra.mxu0 %v1361
    %2108 = vmatmul.bf16.gmra.mxu0 %v246
    %v2109 = vpop.f32.mrf.mxu0
    %v2110 = vadd.f32 %v2097, %v2109
    %v2111 = vpop.f32.mrf.mxu0
    %2112 = vdwg.mxu0
    %2113 = vmatpush.bf16.msra.mxu0 0
    %2114 = vmatpush.bf16.msra.mxu0 0
    %2115 = vmatpush.bf16.msra.mxu0 %v1465
    %2116 = vmatpush.bf16.msra.mxu0 %v1457
    %2117 = vmatpush.bf16.msra.mxu0 %v1449
    %2118 = vmatpush.bf16.msra.mxu0 %v1441
    %2119 = vmatpush.bf16.msra.mxu0 %v1433
    %2120 = vmatpush.bf16.msra.mxu0 %v1425
    %2121 = vmatmul.bf16.gmra.mxu0 %v1708
    %v2122 = vpop.f32.mrf.mxu0
    %v2123 = vadd.f32 %v2110, %v2122
    %v2124 = vpop.f32.mrf.mxu0
    %2125 = vdwg.mxu0
    %v2126 = vmax.f32 %v1759, 0.0
    %v2127 = vmax.f32 %v1811, 0.0
    %v2128 = vmax.f32 %v1863, 0.0
    %v2129 = vmax.f32 %v1915, 0.0
    %v2130 = vmax.f32 %v1967, 0.0
    %v2131 = vmax.f32 %v2019, 0.0
    %v2132 = vmax.f32 %v2071, 0.0
    %v2133 = vmax.f32 %v2123, 0.0
    %v2134 = vpack.c.bf16 %v2126, %v2126
    %v2135 = vpack.c.bf16 %v2127, %v2127
    %v2136 = vpack.c.bf16 %v2128, %v2128
    %v2137 = vpack.c.bf16 %v2129, %v2129
    %v2138 = vpack.c.bf16 %v2130, %v2130
    %v2139 = vpack.c.bf16 %v2131, %v2131
    %v2140 = vpack.c.bf16 %v2132, %v2132
    %v2141 = vpack.c.bf16 %v2133, %v2133
    %v2142 = vld [vmem:[#allocation11] sm:$0xf]
    %v2143 = vld [vmem:[#allocation11 + $0x4] sm:$0xf]
    %v2144 = vld [vmem:[#allocation11 + $0x8] sm:$0xf]
    %v2145 = vld [vmem:[#allocation11 + $0xc] sm:$0xf]
    %v2146 = vld [vmem:[#allocation11 + $0x10] sm:$0xf]
    %v2147 = vld [vmem:[#allocation11 + $0x14] sm:$0xf]
    %v2148 = vld [vmem:[#allocation11 + $0x18] sm:$0xf]
    %v2149 = vld [vmem:[#allocation11 + $0x1c] sm:$0xf]
    %v2150 = vld [vmem:[#allocation11 + $0x20] sm:$0xf]
    %v2151 = vld [vmem:[#allocation11 + $0x24] sm:$0xf]
    %v2152 = vld [vmem:[#allocation11 + $0x28] sm:$0xf]
    %v2153 = vld [vmem:[#allocation11 + $0x2c] sm:$0xf]
    %v2154 = vld [vmem:[#allocation11 + $0x30] sm:$0xf]
    %v2155 = vld [vmem:[#allocation11 + $0x34] sm:$0xf]
    %v2156 = vld [vmem:[#allocation11 + $0x38] sm:$0xf]
    %v2157 = vld [vmem:[#allocation11 + $0x3c] sm:$0xf]
    %v2158 = vld [vmem:[#allocation11 + $0x40] sm:$0xf]
    %v2159 = vld [vmem:[#allocation11 + $0x44] sm:$0xf]
    %v2160 = vld [vmem:[#allocation11 + $0x48] sm:$0xf]
    %v2161 = vld [vmem:[#allocation11 + $0x4c] sm:$0xf]
    %v2162 = vld [vmem:[#allocation11 + $0x50] sm:$0xf]
    %v2163 = vld [vmem:[#allocation11 + $0x54] sm:$0xf]
    %v2164 = vld [vmem:[#allocation11 + $0x58] sm:$0xf]
    %v2165 = vld [vmem:[#allocation11 + $0x5c] sm:$0xf]
    %v2166 = vld [vmem:[#allocation11 + $0x60] sm:$0xf]
    %v2167 = vld [vmem:[#allocation11 + $0x64] sm:$0xf]
    %v2168 = vld [vmem:[#allocation11 + $0x68] sm:$0xf]
    %v2169 = vld [vmem:[#allocation11 + $0x6c] sm:$0xf]
    %v2170 = vld [vmem:[#allocation11 + $0x70] sm:$0xf]
    %v2171 = vld [vmem:[#allocation11 + $0x74] sm:$0xf]
    %v2172 = vld [vmem:[#allocation11 + $0x78] sm:$0xf]
    %v2173 = vld [vmem:[#allocation11 + $0x7c] sm:$0xf]
    %v2174 = vld [vmem:[#allocation11 + $0x80] sm:$0xf]
    %v2175 = vld [vmem:[#allocation11 + $0x84] sm:$0xf]
    %v2176 = vld [vmem:[#allocation11 + $0x88] sm:$0xf]
    %v2177 = vld [vmem:[#allocation11 + $0x8c] sm:$0xf]
    %v2178 = vld [vmem:[#allocation11 + $0x90] sm:$0xf]
    %v2179 = vld [vmem:[#allocation11 + $0x94] sm:$0xf]
    %v2180 = vld [vmem:[#allocation11 + $0x98] sm:$0xf]
    %v2181 = vld [vmem:[#allocation11 + $0x9c] sm:$0xf]
    %v2182 = vld [vmem:[#allocation11 + $0xa0] sm:$0xf]
    %v2183 = vld [vmem:[#allocation11 + $0xa4] sm:$0xf]
    %v2184 = vld [vmem:[#allocation11 + $0xa8] sm:$0xf]
    %v2185 = vld [vmem:[#allocation11 + $0xac] sm:$0xf]
    %v2186 = vld [vmem:[#allocation11 + $0xb0] sm:$0xf]
    %v2187 = vld [vmem:[#allocation11 + $0xb4] sm:$0xf]
    %v2188 = vld [vmem:[#allocation11 + $0xb8] sm:$0xf]
    %v2189 = vld [vmem:[#allocation11 + $0xbc] sm:$0xf]
    %v2190 = vld [vmem:[#allocation11 + $0xc0] sm:$0xf]
    %v2191 = vld [vmem:[#allocation11 + $0xc4] sm:$0xf]
    %v2192 = vld [vmem:[#allocation11 + $0xc8] sm:$0xf]
    %v2193 = vld [vmem:[#allocation11 + $0xcc] sm:$0xf]
    %v2194 = vld [vmem:[#allocation11 + $0xd0] sm:$0xf]
    %v2195 = vld [vmem:[#allocation11 + $0xd4] sm:$0xf]
    %v2196 = vld [vmem:[#allocation11 + $0xd8] sm:$0xf]
    %v2197 = vld [vmem:[#allocation11 + $0xdc] sm:$0xf]
    %v2198 = vld [vmem:[#allocation11 + $0xe0] sm:$0xf]
    %v2199 = vld [vmem:[#allocation11 + $0xe4] sm:$0xf]
    %v2200 = vld [vmem:[#allocation11 + $0xe8] sm:$0xf]
    %v2201 = vld [vmem:[#allocation11 + $0xec] sm:$0xf]
    %v2202 = vld [vmem:[#allocation11 + $0xf0] sm:$0xf]
    %v2203 = vld [vmem:[#allocation11 + $0xf4] sm:$0xf]
    %v2204 = vld [vmem:[#allocation11 + $0xf8] sm:$0xf]
    %v2205 = vld [vmem:[#allocation11 + $0xfc] sm:$0xf]
    %v2206 = vld [vmem:[#allocation11 + $0x100] sm:$0xf]
    %v2207 = vld [vmem:[#allocation11 + $0x104] sm:$0xf]
    %v2208 = vld [vmem:[#allocation11 + $0x108] sm:$0xf]
    %v2209 = vld [vmem:[#allocation11 + $0x10c] sm:$0xf]
    %v2210 = vld [vmem:[#allocation11 + $0x110] sm:$0xf]
    %v2211 = vld [vmem:[#allocation11 + $0x114] sm:$0xf]
    %v2212 = vld [vmem:[#allocation11 + $0x118] sm:$0xf]
    %v2213 = vld [vmem:[#allocation11 + $0x11c] sm:$0xf]
    %v2214 = vld [vmem:[#allocation11 + $0x120] sm:$0xf]
    %v2215 = vld [vmem:[#allocation11 + $0x124] sm:$0xf]
    %v2216 = vld [vmem:[#allocation11 + $0x128] sm:$0xf]
    %v2217 = vld [vmem:[#allocation11 + $0x12c] sm:$0xf]
    %v2218 = vld [vmem:[#allocation11 + $0x130] sm:$0xf]
    %v2219 = vld [vmem:[#allocation11 + $0x134] sm:$0xf]
    %v2220 = vld [vmem:[#allocation11 + $0x138] sm:$0xf]
    %v2221 = vld [vmem:[#allocation11 + $0x13c] sm:$0xf]
    %v2222 = vld [vmem:[#allocation11 + $0x140] sm:$0xf]
    %v2223 = vld [vmem:[#allocation11 + $0x144] sm:$0xf]
    %v2224 = vld [vmem:[#allocation11 + $0x148] sm:$0xf]
    %v2225 = vld [vmem:[#allocation11 + $0x14c] sm:$0xf]
    %v2226 = vld [vmem:[#allocation11 + $0x150] sm:$0xf]
    %v2227 = vld [vmem:[#allocation11 + $0x154] sm:$0xf]
    %v2228 = vld [vmem:[#allocation11 + $0x158] sm:$0xf]
    %v2229 = vld [vmem:[#allocation11 + $0x15c] sm:$0xf]
    %v2230 = vld [vmem:[#allocation11 + $0x160] sm:$0xf]
    %v2231 = vld [vmem:[#allocation11 + $0x164] sm:$0xf]
    %v2232 = vld [vmem:[#allocation11 + $0x168] sm:$0xf]
    %v2233 = vld [vmem:[#allocation11 + $0x16c] sm:$0xf]
    %v2234 = vld [vmem:[#allocation11 + $0x170] sm:$0xf]
    %v2235 = vld [vmem:[#allocation11 + $0x174] sm:$0xf]
    %v2236 = vld [vmem:[#allocation11 + $0x178] sm:$0xf]
    %v2237 = vld [vmem:[#allocation11 + $0x17c] sm:$0xf]
    %v2238 = vld [vmem:[#allocation11 + $0x180] sm:$0xf]
    %v2239 = vld [vmem:[#allocation11 + $0x184] sm:$0xf]
    %v2240 = vld [vmem:[#allocation11 + $0x188] sm:$0xf]
    %v2241 = vld [vmem:[#allocation11 + $0x18c] sm:$0xf]
    %v2242 = vld [vmem:[#allocation11 + $0x190] sm:$0xf]
    %v2243 = vld [vmem:[#allocation11 + $0x194] sm:$0xf]
    %v2244 = vld [vmem:[#allocation11 + $0x198] sm:$0xf]
    %v2245 = vld [vmem:[#allocation11 + $0x19c] sm:$0xf]
    %v2246 = vld [vmem:[#allocation11 + $0x1a0] sm:$0xf]
    %v2247 = vld [vmem:[#allocation11 + $0x1a4] sm:$0xf]
    %v2248 = vld [vmem:[#allocation11 + $0x1a8] sm:$0xf]
    %v2249 = vld [vmem:[#allocation11 + $0x1ac] sm:$0xf]
    %v2250 = vld [vmem:[#allocation11 + $0x1b0] sm:$0xf]
    %v2251 = vld [vmem:[#allocation11 + $0x1b4] sm:$0xf]
    %v2252 = vld [vmem:[#allocation11 + $0x1b8] sm:$0xf]
    %v2253 = vld [vmem:[#allocation11 + $0x1bc] sm:$0xf]
    %v2254 = vld [vmem:[#allocation11 + $0x1c0] sm:$0xf]
    %v2255 = vld [vmem:[#allocation11 + $0x1c4] sm:$0xf]
    %v2256 = vld [vmem:[#allocation11 + $0x1c8] sm:$0xf]
    %v2257 = vld [vmem:[#allocation11 + $0x1cc] sm:$0xf]
    %v2258 = vld [vmem:[#allocation11 + $0x1d0] sm:$0xf]
    %v2259 = vld [vmem:[#allocation11 + $0x1d4] sm:$0xf]
    %v2260 = vld [vmem:[#allocation11 + $0x1d8] sm:$0xf]
    %v2261 = vld [vmem:[#allocation11 + $0x1dc] sm:$0xf]
    %v2262 = vld [vmem:[%s6] sm:$0x1]
    %v2264 = vperm.slane %v2262, 0
    %v2386 = vunpack.c.l.b16 %v2142
    %v2387 = vunpack.c.l.b16 %v2143
    %v2388 = vunpack.c.l.b16 %v2144
    %v2389 = vunpack.c.l.b16 %v2145
    %v2390 = vunpack.c.l.b16 %v2146
    %v2391 = vunpack.c.l.b16 %v2147
    %v2392 = vunpack.c.l.b16 %v2148
    %v2393 = vunpack.c.l.b16 %v2149
    %v2394 = vunpack.c.l.b16 %v2150
    %v2395 = vunpack.c.l.b16 %v2151
    %v2396 = vunpack.c.l.b16 %v2152
    %v2397 = vunpack.c.l.b16 %v2153
    %v2398 = vunpack.c.l.b16 %v2154
    %v2399 = vunpack.c.l.b16 %v2155
    %v2400 = vunpack.c.l.b16 %v2156
    %v2401 = vunpack.c.l.b16 %v2157
    %v2402 = vunpack.c.l.b16 %v2158
    %v2403 = vunpack.c.l.b16 %v2159
    %v2404 = vunpack.c.l.b16 %v2160
    %v2405 = vunpack.c.l.b16 %v2161
    %v2406 = vunpack.c.l.b16 %v2162
    %v2407 = vunpack.c.l.b16 %v2163
    %v2408 = vunpack.c.l.b16 %v2164
    %v2409 = vunpack.c.l.b16 %v2165
    %v2410 = vunpack.c.l.b16 %v2166
    %v2411 = vunpack.c.l.b16 %v2167
    %v2412 = vunpack.c.l.b16 %v2168
    %v2413 = vunpack.c.l.b16 %v2169
    %v2414 = vunpack.c.l.b16 %v2170
    %v2415 = vunpack.c.l.b16 %v2171
    %v2416 = vunpack.c.l.b16 %v2172
    %v2417 = vunpack.c.l.b16 %v2173
    %v2418 = vunpack.c.l.b16 %v2174
    %v2419 = vunpack.c.l.b16 %v2175
    %v2420 = vunpack.c.l.b16 %v2176
    %v2421 = vunpack.c.l.b16 %v2177
    %v2422 = vunpack.c.l.b16 %v2178
    %v2423 = vunpack.c.l.b16 %v2179
    %v2424 = vunpack.c.l.b16 %v2180
    %v2425 = vunpack.c.l.b16 %v2181
    %v2426 = vunpack.c.l.b16 %v2182
    %v2427 = vunpack.c.l.b16 %v2183
    %v2428 = vunpack.c.l.b16 %v2184
    %v2429 = vunpack.c.l.b16 %v2185
    %v2430 = vunpack.c.l.b16 %v2186
    %v2431 = vunpack.c.l.b16 %v2187
    %v2432 = vunpack.c.l.b16 %v2188
    %v2433 = vunpack.c.l.b16 %v2189
    %v2434 = vunpack.c.l.b16 %v2190
    %v2435 = vunpack.c.l.b16 %v2191
    %v2436 = vunpack.c.l.b16 %v2192
    %v2437 = vunpack.c.l.b16 %v2193
    %v2438 = vunpack.c.l.b16 %v2194
    %v2439 = vunpack.c.l.b16 %v2195
    %v2440 = vunpack.c.l.b16 %v2196
    %v2441 = vunpack.c.l.b16 %v2197
    %v2442 = vunpack.c.l.b16 %v2198
    %v2443 = vunpack.c.l.b16 %v2199
    %v2444 = vunpack.c.l.b16 %v2200
    %v2445 = vunpack.c.l.b16 %v2201
    %v2446 = vunpack.c.l.b16 %v2202
    %v2447 = vunpack.c.l.b16 %v2203
    %v2448 = vunpack.c.l.b16 %v2204
    %v2449 = vunpack.c.l.b16 %v2205
    %v2450 = vunpack.c.l.b16 %v2206
    %v2451 = vunpack.c.l.b16 %v2207
    %v2452 = vunpack.c.l.b16 %v2208
    %v2453 = vunpack.c.l.b16 %v2209
    %v2454 = vunpack.c.l.b16 %v2210
    %v2455 = vunpack.c.l.b16 %v2211
    %v2456 = vunpack.c.l.b16 %v2212
    %v2457 = vunpack.c.l.b16 %v2213
    %v2458 = vunpack.c.l.b16 %v2214
    %v2459 = vunpack.c.l.b16 %v2215
    %v2460 = vunpack.c.l.b16 %v2216
    %v2461 = vunpack.c.l.b16 %v2217
    %v2462 = vunpack.c.l.b16 %v2218
    %v2463 = vunpack.c.l.b16 %v2219
    %v2464 = vunpack.c.l.b16 %v2220
    %v2465 = vunpack.c.l.b16 %v2221
    %v2466 = vunpack.c.l.b16 %v2222
    %v2467 = vunpack.c.l.b16 %v2223
    %v2468 = vunpack.c.l.b16 %v2224
    %v2469 = vunpack.c.l.b16 %v2225
    %v2470 = vunpack.c.l.b16 %v2226
    %v2471 = vunpack.c.l.b16 %v2227
    %v2472 = vunpack.c.l.b16 %v2228
    %v2473 = vunpack.c.l.b16 %v2229
    %v2474 = vunpack.c.l.b16 %v2230
    %v2475 = vunpack.c.l.b16 %v2231
    %v2476 = vunpack.c.l.b16 %v2232
    %v2477 = vunpack.c.l.b16 %v2233
    %v2478 = vunpack.c.l.b16 %v2234
    %v2479 = vunpack.c.l.b16 %v2235
    %v2480 = vunpack.c.l.b16 %v2236
    %v2481 = vunpack.c.l.b16 %v2237
    %v2482 = vunpack.c.l.b16 %v2238
    %v2483 = vunpack.c.l.b16 %v2239
    %v2484 = vunpack.c.l.b16 %v2240
    %v2485 = vunpack.c.l.b16 %v2241
    %v2486 = vunpack.c.l.b16 %v2242
    %v2487 = vunpack.c.l.b16 %v2243
    %v2488 = vunpack.c.l.b16 %v2244
    %v2489 = vunpack.c.l.b16 %v2245
    %v2490 = vunpack.c.l.b16 %v2246
    %v2491 = vunpack.c.l.b16 %v2247
    %v2492 = vunpack.c.l.b16 %v2248
    %v2493 = vunpack.c.l.b16 %v2249
    %v2494 = vunpack.c.l.b16 %v2250
    %v2495 = vunpack.c.l.b16 %v2251
    %v2496 = vunpack.c.l.b16 %v2252
    %v2497 = vunpack.c.l.b16 %v2253
    %v2498 = vunpack.c.l.b16 %v2254
    %v2499 = vunpack.c.l.b16 %v2255
    %v2500 = vunpack.c.l.b16 %v2256
    %v2501 = vunpack.c.l.b16 %v2257
    %v2502 = vunpack.c.l.b16 %v2258
    %v2503 = vunpack.c.l.b16 %v2259
    %v2504 = vunpack.c.l.b16 %v2260
    %v2505 = vunpack.c.l.b16 %v2261
    %v2506 = vpack.c.b16 %v2387, %v2386
    %v2507 = vpack.c.b16 %v2389, %v2388
    %v2508 = vpack.c.b16 %v2391, %v2390
    %v2509 = vpack.c.b16 %v2393, %v2392
    %v2510 = vpack.c.b16 %v2395, %v2394
    %v2511 = vpack.c.b16 %v2397, %v2396
    %v2512 = vpack.c.b16 %v2399, %v2398
    %v2513 = vpack.c.b16 %v2401, %v2400
    %v2514 = vpack.c.b16 %v2403, %v2402
    %v2515 = vpack.c.b16 %v2405, %v2404
    %v2516 = vpack.c.b16 %v2407, %v2406
    %v2517 = vpack.c.b16 %v2409, %v2408
    %v2518 = vpack.c.b16 %v2411, %v2410
    %v2519 = vpack.c.b16 %v2413, %v2412
    %v2520 = vpack.c.b16 %v2415, %v2414
    %v2521 = vpack.c.b16 %v2417, %v2416
    %v2522 = vpack.c.b16 %v2419, %v2418
    %v2523 = vpack.c.b16 %v2421, %v2420
    %v2524 = vpack.c.b16 %v2423, %v2422
    %v2525 = vpack.c.b16 %v2425, %v2424
    %v2526 = vpack.c.b16 %v2427, %v2426
    %v2527 = vpack.c.b16 %v2429, %v2428
    %v2528 = vpack.c.b16 %v2431, %v2430
    %v2529 = vpack.c.b16 %v2433, %v2432
    %v2530 = vpack.c.b16 %v2435, %v2434
    %v2531 = vpack.c.b16 %v2437, %v2436
    %v2532 = vpack.c.b16 %v2439, %v2438
    %v2533 = vpack.c.b16 %v2441, %v2440
    %v2534 = vpack.c.b16 %v2443, %v2442
    %v2535 = vpack.c.b16 %v2445, %v2444
    %v2536 = vpack.c.b16 %v2447, %v2446
    %v2537 = vpack.c.b16 %v2449, %v2448
    %v2538 = vpack.c.b16 %v2451, %v2450
    %v2539 = vpack.c.b16 %v2453, %v2452
    %v2540 = vpack.c.b16 %v2455, %v2454
    %v2541 = vpack.c.b16 %v2457, %v2456
    %v2542 = vpack.c.b16 %v2459, %v2458
    %v2543 = vpack.c.b16 %v2461, %v2460
    %v2544 = vpack.c.b16 %v2463, %v2462
    %v2545 = vpack.c.b16 %v2465, %v2464
    %v2546 = vpack.c.b16 %v2467, %v2466
    %v2547 = vpack.c.b16 %v2469, %v2468
    %v2548 = vpack.c.b16 %v2471, %v2470
    %v2549 = vpack.c.b16 %v2473, %v2472
    %v2550 = vpack.c.b16 %v2475, %v2474
    %v2551 = vpack.c.b16 %v2477, %v2476
    %v2552 = vpack.c.b16 %v2479, %v2478
    %v2553 = vpack.c.b16 %v2481, %v2480
    %v2554 = vpack.c.b16 %v2483, %v2482
    %v2555 = vpack.c.b16 %v2485, %v2484
    %v2556 = vpack.c.b16 %v2487, %v2486
    %v2557 = vpack.c.b16 %v2489, %v2488
    %v2558 = vpack.c.b16 %v2491, %v2490
    %v2559 = vpack.c.b16 %v2493, %v2492
    %v2560 = vpack.c.b16 %v2495, %v2494
    %v2561 = vpack.c.b16 %v2497, %v2496
    %v2562 = vpack.c.b16 %v2499, %v2498
    %v2563 = vpack.c.b16 %v2501, %v2500
    %v2564 = vpack.c.b16 %v2503, %v2502
    %v2565 = vpack.c.b16 %v2505, %v2504
    %vm2626 = vcmask 523264
    %v2628 = vsel %vm2626, %v2141, 0
    %2630 = vmatpush.bf16.msra.mxu0 %v2513
    %2631 = vmatpush.bf16.msra.mxu0 %v2512
    %2632 = vmatpush.bf16.msra.mxu0 %v2511
    %2633 = vmatpush.bf16.msra.mxu0 %v2510
    %2634 = vmatpush.bf16.msra.mxu0 %v2509
    %2635 = vmatpush.bf16.msra.mxu0 %v2508
    %2636 = vmatpush.bf16.msra.mxu0 %v2507
    %2637 = vmatpush.bf16.msra.mxu0 %v2506
    %2638 = vmatmul.bf16.gmra.mxu0 %v2134
    %v2639 = vpop.f32.mrf.mxu0
    %v2640 = vadd.f32 %v2264, %v2639
    %v2641 = vpop.f32.mrf.mxu0
    %2642 = vdwg.mxu0
    %2643 = vmatpush.bf16.msra.mxu0 %v2521
    %2644 = vmatpush.bf16.msra.mxu0 %v2520
    %2645 = vmatpush.bf16.msra.mxu0 %v2519
    %2646 = vmatpush.bf16.msra.mxu0 %v2518
    %2647 = vmatpush.bf16.msra.mxu0 %v2517
    %2648 = vmatpush.bf16.msra.mxu0 %v2516
    %2649 = vmatpush.bf16.msra.mxu0 %v2515
    %2650 = vmatpush.bf16.msra.mxu0 %v2514
    %2651 = vmatmul.bf16.gmra.mxu0 %v2135
    %v2652 = vpop.f32.mrf.mxu0
    %v2653 = vadd.f32 %v2640, %v2652
    %v2654 = vpop.f32.mrf.mxu0
    %2655 = vdwg.mxu0
    %2656 = vmatpush.bf16.msra.mxu0 %v2529
    %2657 = vmatpush.bf16.msra.mxu0 %v2528
    %2658 = vmatpush.bf16.msra.mxu0 %v2527
    %2659 = vmatpush.bf16.msra.mxu0 %v2526
    %2660 = vmatpush.bf16.msra.mxu0 %v2525
    %2661 = vmatpush.bf16.msra.mxu0 %v2524
    %2662 = vmatpush.bf16.msra.mxu0 %v2523
    %2663 = vmatpush.bf16.msra.mxu0 %v2522
    %2664 = vmatmul.bf16.gmra.mxu0 %v2136
    %v2665 = vpop.f32.mrf.mxu0
    %v2666 = vadd.f32 %v2653, %v2665
    %v2667 = vpop.f32.mrf.mxu0
    %2668 = vdwg.mxu0
    %2669 = vmatpush.bf16.msra.mxu0 %v2537
    %2670 = vmatpush.bf16.msra.mxu0 %v2536
    %2671 = vmatpush.bf16.msra.mxu0 %v2535
    %2672 = vmatpush.bf16.msra.mxu0 %v2534
    %2673 = vmatpush.bf16.msra.mxu0 %v2533
    %2674 = vmatpush.bf16.msra.mxu0 %v2532
    %2675 = vmatpush.bf16.msra.mxu0 %v2531
    %2676 = vmatpush.bf16.msra.mxu0 %v2530
    %2677 = vmatmul.bf16.gmra.mxu0 %v2137
    %v2678 = vpop.f32.mrf.mxu0
    %v2679 = vadd.f32 %v2666, %v2678
    %v2680 = vpop.f32.mrf.mxu0
    %2681 = vdwg.mxu0
    %2682 = vmatpush.bf16.msra.mxu0 %v2545
    %2683 = vmatpush.bf16.msra.mxu0 %v2544
    %2684 = vmatpush.bf16.msra.mxu0 %v2543
    %2685 = vmatpush.bf16.msra.mxu0 %v2542
    %2686 = vmatpush.bf16.msra.mxu0 %v2541
    %2687 = vmatpush.bf16.msra.mxu0 %v2540
    %2688 = vmatpush.bf16.msra.mxu0 %v2539
    %2689 = vmatpush.bf16.msra.mxu0 %v2538
    %2690 = vmatmul.bf16.gmra.mxu0 %v2138
    %v2691 = vpop.f32.mrf.mxu0
    %v2692 = vadd.f32 %v2679, %v2691
    %v2693 = vpop.f32.mrf.mxu0
    %2694 = vdwg.mxu0
    %2695 = vmatpush.bf16.msra.mxu0 %v2553
    %2696 = vmatpush.bf16.msra.mxu0 %v2552
    %2697 = vmatpush.bf16.msra.mxu0 %v2551
    %2698 = vmatpush.bf16.msra.mxu0 %v2550
    %2699 = vmatpush.bf16.msra.mxu0 %v2549
    %2700 = vmatpush.bf16.msra.mxu0 %v2548
    %2701 = vmatpush.bf16.msra.mxu0 %v2547
    %2702 = vmatpush.bf16.msra.mxu0 %v2546
    %2703 = vmatmul.bf16.gmra.mxu0 %v2139
    %v2704 = vpop.f32.mrf.mxu0
    %v2705 = vadd.f32 %v2692, %v2704
    %v2706 = vpop.f32.mrf.mxu0
    %2707 = vdwg.mxu0
    %2708 = vmatpush.bf16.msra.mxu0 %v2561
    %2709 = vmatpush.bf16.msra.mxu0 %v2560
    %2710 = vmatpush.bf16.msra.mxu0 %v2559
    %2711 = vmatpush.bf16.msra.mxu0 %v2558
    %2712 = vmatpush.bf16.msra.mxu0 %v2557
    %2713 = vmatpush.bf16.msra.mxu0 %v2556
    %2714 = vmatpush.bf16.msra.mxu0 %v2555
    %2715 = vmatpush.bf16.msra.mxu0 %v2554
    %2716 = vmatmul.bf16.gmra.mxu0 %v2140
    %v2717 = vpop.f32.mrf.mxu0
    %v2718 = vadd.f32 %v2705, %v2717
    %v2719 = vpop.f32.mrf.mxu0
    %2720 = vdwg.mxu0
    %2721 = vmatpush.bf16.msra.mxu0 0
    %2722 = vmatpush.bf16.msra.mxu0 0
    %2723 = vmatpush.bf16.msra.mxu0 0
    %2724 = vmatpush.bf16.msra.mxu0 0
    %2725 = vmatpush.bf16.msra.mxu0 %v2565
    %2726 = vmatpush.bf16.msra.mxu0 %v2564
    %2727 = vmatpush.bf16.msra.mxu0 %v2563
    %2728 = vmatpush.bf16.msra.mxu0 %v2562
    %2729 = vmatmul.bf16.gmra.mxu0 %v2628
    %v2730 = vpop.f32.mrf.mxu0
    %v2731 = vadd.f32 %v2718, %v2730
    %v2732 = vpop.f32.mrf.mxu0
    %2733 = vdwg.mxu0
    %v2734 = vmax.f32 %v2731, 0.0
    %v2735 = vpack.c.bf16 %v2734, %v2734
    %v2736 = vld [vmem:[#allocation13] sm:$0xf]
    %v2737 = vld [vmem:[#allocation13 + $0x4] sm:$0xf]
    %v2738 = vld [vmem:[#allocation13 + $0x8] sm:$0xf]
    %v2739 = vld [vmem:[#allocation13 + $0xc] sm:$0xf]
    %v2740 = vld [vmem:[#allocation13 + $0x10] sm:$0xf]
    %v2741 = vld [vmem:[#allocation13 + $0x14] sm:$0xf]
    %v2742 = vld [vmem:[#allocation13 + $0x18] sm:$0xf]
    %v2743 = vld [vmem:[#allocation13 + $0x1c] sm:$0xf]
    %v2744 = vld [vmem:[#allocation13 + $0x20] sm:$0xf]
    %v2745 = vld [vmem:[#allocation13 + $0x24] sm:$0xf]
    %v2746 = vld [vmem:[#allocation13 + $0x28] sm:$0xf]
    %v2747 = vld [vmem:[#allocation13 + $0x2c] sm:$0xf]
    %v2748 = vld [vmem:[#allocation13 + $0x30] sm:$0xf]
    %v2749 = vld [vmem:[#allocation13 + $0x34] sm:$0xf]
    %v2750 = vld [vmem:[#allocation13 + $0x38] sm:$0xf]
    %v2751 = vld [vmem:[#allocation13 + $0x3c] sm:$0xf]
    %v2752 = vld [vmem:[%s8] sm:$0x1]
    %v2754 = vperm.slane %v2752, 0
    %v2772 = vunpack.c.l.b16 %v2736
    %v2773 = vunpack.c.l.b16 %v2737
    %v2774 = vunpack.c.l.b16 %v2738
    %v2775 = vunpack.c.l.b16 %v2739
    %v2776 = vunpack.c.l.b16 %v2740
    %v2777 = vunpack.c.l.b16 %v2741
    %v2778 = vunpack.c.l.b16 %v2742
    %v2779 = vunpack.c.l.b16 %v2743
    %v2780 = vunpack.c.l.b16 %v2744
    %v2781 = vunpack.c.l.b16 %v2745
    %v2782 = vunpack.c.l.b16 %v2746
    %v2783 = vunpack.c.l.b16 %v2747
    %v2784 = vunpack.c.l.b16 %v2748
    %v2785 = vunpack.c.l.b16 %v2749
    %v2786 = vunpack.c.l.b16 %v2750
    %v2787 = vunpack.c.l.b16 %v2751
    %v2788 = vpack.c.b16 %v2773, %v2772
    %v2789 = vpack.c.b16 %v2775, %v2774
    %v2790 = vpack.c.b16 %v2777, %v2776
    %v2791 = vpack.c.b16 %v2779, %v2778
    %v2792 = vpack.c.b16 %v2781, %v2780
    %v2793 = vpack.c.b16 %v2783, %v2782
    %v2794 = vpack.c.b16 %v2785, %v2784
    %v2795 = vpack.c.b16 %v2787, %v2786
    %2804 = vmatpush.bf16.msra.mxu0 %v2795
    %2805 = vmatpush.bf16.msra.mxu0 %v2794
    %2806 = vmatpush.bf16.msra.mxu0 %v2793
    %2807 = vmatpush.bf16.msra.mxu0 %v2792
    %2808 = vmatpush.bf16.msra.mxu0 %v2791
    %2809 = vmatpush.bf16.msra.mxu0 %v2790
    %2810 = vmatpush.bf16.msra.mxu0 %v2789
    %2811 = vmatpush.bf16.msra.mxu0 %v2788
    %2812 = vmatmul.bf16.gmra.mxu0 %v2735
    %v2813 = vpop.f32.mrf.mxu0
    %v2814 = vadd.f32 %v2754, %v2813
    %v2815 = vpop.f32.mrf.mxu0
    %2816 = vdwg.mxu0
    %2817 = vst [vmem:[#allocation14] sm:$0xff] %v2814
    // Predicated region
    $region66: #{tpu_custom_call.1} parent=1 // pred_check
      _
    $region67: #{tpu_custom_call.1} parent=1 // pred_check_branch
      %2819 = sbr.rel (0) target = $region69
    $region68: #{tpu_custom_call.1} parent=1 // pred_region
      %2821 = vsyncadd [#allocation4], 0
      %s2823 = sshll.u32 [#allocation14], 4
      %s2824 = int_to_ptr.vmem [resolvable:$true] %s2823
      %s2825 = sshll.u32 %s9, 4
      %s2826 = int_to_ptr.hbm [resolvable:$true] %s2825
      %2828 = dma.vmem_to_hbm [thread:$0]  %s2824, 128, %s2826, [#allocation4]
    $region69: #{tpu_custom_call.1} parent=1 // pred_fallthru
      _
    // Predicated region
    $region70: #{tpu_custom_call.1} parent=1 // pred_check
      _
    $region71: #{tpu_custom_call.1} parent=1 // pred_check_branch
      %2830 = sbr.rel (0) target = $region73
    $region72: #{tpu_custom_call.1} parent=1 // pred_region
      %2832 = dma.done [#allocation4], 128
    $region73: #{tpu_custom_call.1} parent=1 // pred_fallthru
      _
    %2833 = vsyncpa [#allocation3], 1
    %2834 = vsyncpa [#allocation6], 1
    %2835 = vsyncpa [#allocation9], 1
    %2836 = vsyncpa [#allocation12], 1
    %2837 = vsyncpa [#allocation4], 1

</llo_original>
